<compile_context>
chip_gen: v5e
topology: v5e:2x2
jax: 0.10.0
libtpu: 0.0.40
codegen_flags: <defaults>
</compile_context>

<pallas_src>
import functools

import numpy as np

import jax
import jax.numpy as jnp
from jax import lax
from jax.experimental import pallas as pl
from jax.experimental.pallas import tpu as pltpu


# ---------------------------------------------------------------------------
# Kernels
# ---------------------------------------------------------------------------

def _waveletatt_kernel(s_ref, x_ref, w1t_ref, w2t_ref, benc_ref, wencrows_ref,
                       g_ref, gt_ref, e_ref, o_ref, *, factor):
    """Single-pass fused kernel: one block of `bb` batches, all channels, all HW."""
    f32 = jnp.float32
    nsub = s_ref.shape[1]
    block_b = gt_ref.shape[0]

    x2d = x_ref[...]                                   # (R, HW), R = bb*C

    # (1) Haar DWT + AdaptiveAvgPool2d(1): signed spatial sums as ONE MXU
    #     matmul with f32 accumulation; sign columns ordered [LL, HL, LH, HH]
    #     to match the forward's stack.
    ori = jnp.dot(x2d, s_ref[...], preferred_element_type=f32) * factor   # (R, 4)

    G = g_ref[...]                                     # (R, Bb) row -> batch one-hot
    Gt = gt_ref[...]                                   # (Bb, R)
    E = e_ref[...]                                     # (R, C)  row -> channel one-hot

    # (2) recalib('max'): enc = Linear(C,1)+Sigmoid scores the 4 subbands; pick
    #     the argmax subband per batch.  Sigmoid is monotone and the bias is
    #     subband-constant, so only the linear argmax matters (bias kept for
    #     fidelity).  First-max tie-break like torch.
    scores = jnp.dot(Gt, ori * wencrows_ref[...],
                     preferred_element_type=f32) + benc_ref[...]          # (Bb, 4)
    iota4 = lax.broadcasted_iota(jnp.int32, (block_b, nsub), 1)
    mx = jnp.max(scores, axis=1, keepdims=True)
    idx = jnp.min(jnp.where(scores == mx, iota4, nsub), axis=1, keepdims=True)
    onehot = (iota4 == idx).astype(f32)                                   # (Bb, 4)
    # TODO(synk): NaN enc scores make onehot all-zero (Q=0), which differs from
    #             torch argmax/sort behavior under NaN.

    onehot_rows = jnp.dot(G, onehot, preferred_element_type=f32)          # (R, 4)
    q_rows = jnp.sum(ori * onehot_rows, axis=1, keepdims=True)            # (R, 1)
    y_rows = jnp.sum(jnp.maximum(ori - q_rows, 0.0), axis=1, keepdims=True)  # (R, 1)

    # (3) fc: Linear(C,C//2,no bias) -> ReLU -> Linear(C//2,C,no bias) ->
    #     Sigmoid, batched over Bb on the MXU (weights stay in native dtype,
    #     accumulation in f32).
    y_bc = jnp.dot(Gt, E * y_rows, preferred_element_type=f32)            # (Bb, C)
    h = jnp.maximum(jnp.dot(y_bc, w1t_ref[...], preferred_element_type=f32), 0.0)
    scale = jax.nn.sigmoid(jnp.dot(h, w2t_ref[...], preferred_element_type=f32))  # (Bb, C)

    # (4) out = x * scale: per-(batch,channel) scalar broadcast along lanes.
    #     The scale is cast to x.dtype first, matching a same-dtype PyTorch
    #     module (nn.Sigmoid output is already in x.dtype there).
    gscale = jnp.dot(G, scale, preferred_element_type=f32)                # (R, C)
    scale_rows = jnp.sum(gscale * E, axis=1, keepdims=True)               # (R, 1)
    o_ref[...] = x2d * scale_rows.astype(x2d.dtype)


def _subband_sums_kernel(s_ref, x_ref, o_ref):
    """Fallback pass 1: signed spatial sums for one (batch, channel-chunk)."""
    o_ref[0] = jnp.dot(x_ref[0], s_ref[...], preferred_element_type=jnp.float32)


def _apply_scale_kernel(x_ref, sc_ref, o_ref):
    """Fallback pass 2: out = x * per-channel scale."""
    o_ref[0] = x_ref[0] * sc_ref[0]


# ---------------------------------------------------------------------------
# Hardware / sizing helpers
# ---------------------------------------------------------------------------

def _round_up(v, m):
    return ((v + m - 1) // m) * m


def _vmem_capacity_bytes():
    try:
        return int(pltpu.get_tpu_info().vmem_capacity_bytes)
    except Exception:
        return 64 * 1024 * 1024            # conservative: v7x per-TC capacity


def _num_tensorcores():
    try:
        kind = jax.devices()[0].device_kind.lower()
        return 2 if "v7" in kind else 1
    except Exception:
        return 1


def _sublane_align(itemsize):
    return {4: 8, 2: 16, 1: 32}.get(itemsize, 8)


def _est_vmem_bytes(bb, channels, hw, itemsize):
    """Rough single-pass-kernel VMEM footprint for a block of `bb` batches."""
    r = bb * channels
    hw_lanes = _round_up(hw, 128)
    half = max(channels // 2, 1)
    # x in + out blocks, double-buffered.
    x_blocks = 4 * _round_up(r, 8) * hw_lanes * itemsize
    # Resident constants (assumed single-buffered): sign matrix (lane dim 4
    # pads to 128 lanes), fc weights, enc bias, indicator matrices, enc rows.
    consts = (_round_up(hw, 8) * 128 * itemsize
              + _round_up(channels, 8) * _round_up(half, 128) * itemsize
              + _round_up(half, 8) * _round_up(channels, 128) * itemsize
              + 8 * 128 * itemsize
              + _round_up(r, 8) * _round_up(bb, 128) * 4        # G
              + _round_up(bb, 8) * _round_up(r, 128) * 4        # Gt
              + _round_up(r, 8) * _round_up(channels, 128) * 4  # E
              + _round_up(r, 8) * 128 * 4)                      # wenc_rows
    # In-kernel f32 temporaries: ~6 skinny (R, <=4) slabs (lane-padded to 128)
    # plus the (R, C) slabs for E*y_rows and G@scale.
    temps = (6 * _round_up(r, 8) * 128 * 4
             + 2 * _round_up(r, 8) * _round_up(channels, 128) * 4)
    return x_blocks + consts + temps


def _pick_block_b(batch, channels, hw, itemsize, vmem_cap, num_tc):
    """Largest batch-block that fits the VMEM budget, preferring (a) sublane
    alignment for the block's second-minor extent and (b) an even split of
    grid steps across TensorCores on dual-TC parts.  Returns None when even a
    single batch over-fills VMEM (caller uses the two-pass fallback)."""
    sub_align = _sublane_align(itemsize)
    budget = int(vmem_cap * 0.6)
    divisors = sorted((d for d in range(1, batch + 1) if batch % d == 0), reverse=True)
    fitting = [d for d in divisors if _est_vmem_bytes(d, channels, hw, itemsize) <= budget]
    if not fitting:
        return None

    def aligned(d):
        return (d * channels) % sub_align == 0 or d == batch

    def parallel_ok(d):
        steps = batch // d
        return num_tc == 1 or steps % num_tc == 0

    for pred in (lambda d: aligned(d) and parallel_ok(d), aligned, lambda d: True):
        for d in fitting:                       # descending: biggest block first
            if pred(d):
                return d
    return fitting[-1]


def _haar_sign_matrix(H, W):
    """(HW, 4) +/-1 sign matrix; columns in the forward's stack order
    [x_LL, x_HL, x_LH, x_HH]."""
    pos = np.arange(H * W)
    srow = np.where((pos // W) % 2 == 1, 1.0, -1.0).astype(np.float32)
    scol = np.where((pos % W) % 2 == 1, 1.0, -1.0).astype(np.float32)
    return np.stack([np.ones_like(srow), scol, srow, srow * scol], axis=1)


# ---------------------------------------------------------------------------
# Wrapper
# ---------------------------------------------------------------------------

def waveletatt_afterlayer(x, w1, w2, w_enc, b_enc, *, block_b=None,
                          donate_x=False, force_two_pass=False):
    """x: (B, C, H, W) NCHW; w1: (C//2, C); w2: (C, C//2); w_enc: (C, 1);
    b_enc: (1, 1).  Returns (B, C, H, W)."""
    B, C, H, W = x.shape
    if H % 2 or W % 2:
        # TODO(synk): reference `self.pad` (odd-H branch) is undefined in the source.
        raise ValueError("Waveletatt_afterlayer kernel requires even H and W")
    HW = H * W
    factor = 1.0 / (2.0 * (H // 2) * (W // 2))   # dwt /2 and adaptive-avg-pool mean
    itemsize = x.dtype.itemsize

    vmem_cap = _vmem_capacity_bytes()
    num_tc = _num_tensorcores()

    smat = _haar_sign_matrix(H, W).astype(x.dtype)          # (HW, 4) compile-time const

    bb = block_b if block_b is not None else _pick_block_b(B, C, HW, itemsize,
                                                           vmem_cap, num_tc)
    if force_two_pass or bb is None:
        return _two_pass_path(x, smat, w1, w2, w_enc, b_enc, factor,
                              vmem_cap, itemsize)

    if B % bb:
        raise ValueError(f"block_b={bb} must divide batch={B}")
    grid_b = B // bb
    R = bb * C

    # Grid-invariant indicator constants (numpy, folded at compile time):
    # row r of a block belongs to block-local batch r // C and channel r % C.
    rows = np.arange(R)
    G = (rows[:, None] // C == np.arange(bb)[None, :]).astype(np.float32)   # (R, bb)
    Gt = (np.arange(bb)[:, None] == rows[None, :] // C).astype(np.float32)  # (bb, R)
    E = (rows[:, None] % C == np.arange(C)[None, :]).astype(np.float32)     # (R, C)

    w1t = jnp.asarray(w1).T                                   # (C, C//2) native dtype
    w2t = jnp.asarray(w2).T                                   # (C//2, C)
    benc = jnp.asarray(b_enc, jnp.float32).reshape(1, 1)
    wenc_rows = jnp.tile(jnp.asarray(w_enc, jnp.float32).reshape(C, 1), (bb, 1))  # (R, 1)

    x2d = x.reshape(B * C, HW)                                # free reshape, no HBM copy

    est = _est_vmem_bytes(bb, C, HW, itemsize)
    vmem_limit = int(min(vmem_cap, max(32 << 20, est + (8 << 20))))

    kernel = functools.partial(_waveletatt_kernel, factor=factor)

    def build(single_buffer_consts):
        def const_spec(shape):
            n = len(shape)
            if single_buffer_consts:
                return pl.BlockSpec(shape, lambda *_: (0,) * n,
                                    pipeline_mode=pl.Buffered(1))
            return pl.BlockSpec(shape, lambda *_: (0,) * n)

        return pl.pallas_call(
            kernel,
            out_shape=jax.ShapeDtypeStruct((B * C, HW), x.dtype),
            grid_spec=pltpu.PrefetchScalarGridSpec(
                num_scalar_prefetch=0,
                grid=(grid_b,),
                in_specs=[
                    const_spec((HW, 4)),                        # Haar sign matrix (resident)
                    pl.BlockSpec((R, HW), lambda b: (b, 0)),    # x rows for this block
                    const_spec((C, C // 2)),                    # fc.0 weight^T
                    const_spec((C // 2, C)),                    # fc.2 weight^T
                    const_spec((1, 1)),                         # enc.0 bias
                    const_spec((R, 1)),                         # enc.0 weight tiled per row
                    const_spec((R, bb)),                        # G  row -> batch
                    const_spec((bb, R)),                        # Gt
                    const_spec((R, C)),                         # E  row -> channel
                ],
                out_specs=pl.BlockSpec((R, HW), lambda b: (b, 0)),
            ),
            input_output_aliases=({1: 0} if donate_x else {}),
            compiler_params=pltpu.CompilerParams(
                dimension_semantics=("parallel",),
                vmem_limit_bytes=vmem_limit,
            ),
        )

    args = (smat, x2d, w1t, w2t, benc, wenc_rows, G, Gt, E)
    try:
        out2d = build(True)(*args)
    except Exception:
        # TODO(synk): pl.Buffered(1) single-buffered constants unsupported on this
        #             jax build; retry with default double-buffered constants.
        out2d = build(False)(*args)

    return out2d.reshape(B, C, H, W)


def _two_pass_path(x, smat, w1, w2, w_enc, b_enc, factor, vmem_cap, itemsize):
    """VMEM fallback: (1) stream x and accumulate the (B,C,4) signed subband
    sums; (2) tiny pure-JAX recalib + fc; (3) stream x again applying the
    per-(batch,channel) scale.  Three HBM passes over x instead of two, but it
    works when a single batch no longer fits VMEM (e.g. big C*HW on v7x)."""
    B, C, H, W = x.shape
    HW = H * W
    sub_align = _sublane_align(itemsize)
    budget = int(vmem_cap * 0.5)

    cands = sorted(d for d in range(1, C + 1)
                   if C % d == 0 and (d % sub_align == 0 or d == C))
    tc = cands[0]
    for d in cands:
        if 4 * d * _round_up(HW, 128) * itemsize + (4 << 20) <= budget:
            tc = d
    # TODO(synk): if even the smallest channel chunk over-fills VMEM (extreme
    #             H*W), the spatial axis itself would need tiling; not implemented.

    grid = (B, C // tc)
    x3 = x.reshape(B, C, HW)                                   # free reshape
    vmem_limit = int(min(vmem_cap,
                         max(32 << 20,
                             4 * tc * _round_up(HW, 128) * itemsize + (8 << 20))))
    cparams = pltpu.CompilerParams(dimension_semantics=("parallel", "parallel"),
                                   vmem_limit_bytes=vmem_limit)

    def build_pass1(single):
        if single:
            smat_spec = pl.BlockSpec((HW, 4), lambda b, c: (0, 0),
                                     pipeline_mode=pl.Buffered(1))
        else:
            smat_spec = pl.BlockSpec((HW, 4), lambda b, c: (0, 0))
        return pl.pallas_call(
            _subband_sums_kernel,
            out_shape=jax.ShapeDtypeStruct((B, C, 4), jnp.float32),
            grid_spec=pltpu.PrefetchScalarGridSpec(
                num_scalar_prefetch=0, grid=grid,
                in_specs=[smat_spec,
                          pl.BlockSpec((1, tc, HW), lambda b, c: (b, c, 0))],
                out_specs=pl.BlockSpec((1, tc, 4), lambda b, c: (b, c, 0))),
            compiler_params=cparams)

    try:
        ori = build_pass1(True)(smat, x3)
    except Exception:
        ori = build_pass1(False)(smat, x3)

    # Tiny per-batch recalib('max') + fc in plain JAX (O(B*C) work).
    ori_y = jnp.transpose(ori, (0, 2, 1)) * factor                         # (B, 4, C)
    scores = ori_y @ jnp.asarray(w_enc, jnp.float32) \
        + jnp.asarray(b_enc, jnp.float32)[0]                               # sigmoid monotone
    idx = jnp.argmax(scores[..., 0], axis=1)
    Q = jnp.take_along_axis(ori_y, idx[:, None, None], axis=1)             # (B, 1, C)
    y = jnp.sum(jnp.maximum(ori_y - Q, 0.0), axis=1)                       # (B, C)
    h = jnp.maximum(y @ jnp.asarray(w1, jnp.float32).T, 0.0)
    scale = jax.nn.sigmoid(h @ jnp.asarray(w2, jnp.float32).T)             # (B, C)
    scale3 = scale.astype(x.dtype)[:, :, None]                             # (B, C, 1)

    out3 = pl.pallas_call(
        _apply_scale_kernel,
        out_shape=jax.ShapeDtypeStruct((B, C, HW), x.dtype),
        grid_spec=pltpu.PrefetchScalarGridSpec(
            num_scalar_prefetch=0, grid=grid,
            in_specs=[pl.BlockSpec((1, tc, HW), lambda b, c: (b, c, 0)),
                      pl.BlockSpec((1, tc, 1), lambda b, c: (b, c, 0))],
            out_specs=pl.BlockSpec((1, tc, HW), lambda b, c: (b, c, 0))),
        compiler_params=cparams)(x3, scale3)
    return out3.reshape(B, C, H, W)


# ---------------------------------------------------------------------------
# Pure-JAX reference (mirror of the PyTorch forward) for validation
# ---------------------------------------------------------------------------

def _reference(x, w1, w2, w_enc, b_enc):
    B, C, H, W = x.shape
    x01 = x[:, :, 0::2, :] / 2
    x02 = x[:, :, 1::2, :] / 2
    x1 = x01[:, :, :, 0::2]
    x2 = x02[:, :, :, 0::2]
    x3 = x01[:, :, :, 1::2]
    x4 = x02[:, :, :, 1::2]
    LL = x1 + x2 + x3 + x4
    HL = -x1 - x2 + x3 + x4
    LH = -x1 + x2 - x3 + x4
    HH = x1 - x2 - x3 + x4
    # forward stacks its (LL, LH, HL, HH) names == dwt's (x_LL, x_HL, x_LH, x_HH)
    stacked = jnp.stack([LL, HL, LH, HH], axis=1)               # (B, 4, C, H/2, W/2)
    ori_y = jnp.mean(stacked, axis=(3, 4))                      # (B, 4, C)
    scores = jax.nn.sigmoid(ori_y @ w_enc + b_enc[0])           # (B, 4, 1)
    idx = jnp.argmax(scores[..., 0], axis=1)                    # (B,)
    Q = jnp.take_along_axis(ori_y, idx[:, None, None], axis=1)  # (B, 1, C)
    y = jnp.sum(jnp.maximum(ori_y - Q, 0.0), axis=1)            # (B, C)
    h = jnp.maximum(y @ w1.T, 0.0)                              # (B, C//2)
    s = jax.nn.sigmoid(h @ w2.T)                                # (B, C)
    return x * s[:, :, None, None]


if __name__ == "__main__":
    def make_params(C, key):
        k1, k2, k3, k4 = jax.random.split(key, 4)
        w1 = jax.random.normal(k1, (C // 2, C), jnp.float32) * (1.0 / jnp.sqrt(C))       # fc.0
        w2 = jax.random.normal(k2, (C, C // 2), jnp.float32) * (1.0 / jnp.sqrt(C // 2))  # fc.2
        w_enc = jax.random.normal(k3, (C, 1), jnp.float32) * (1.0 / jnp.sqrt(C))         # enc.0 w^T
        b_enc = jax.random.normal(k4, (1, 1), jnp.float32) * 0.1                         # enc.0 bias
        return w1, w2, w_enc, b_enc

    key = jax.random.PRNGKey(0)
    configs = [
        ((4, 8, 16, 16), False),   # HW multiple of 128, fused single-pass path
        ((2, 8, 14, 14), False),   # HW=196: masked lane tail, no wrapper pad/crop
        ((2, 8, 16, 16), True),    # VMEM two-pass fallback path
    ]
    for shape, two_pass in configs:
        B, C, H, W = shape
        key, kx, kp = jax.random.split(key, 3)
        x = jax.random.normal(kx, (B, C, H, W), dtype=jnp.float32)
        w1, w2, w_enc, b_enc = make_params(C, kp)

        out = jax.block_until_ready(
            waveletatt_afterlayer(x, w1, w2, w_enc, b_enc, force_two_pass=two_pass))
        ref = _reference(x, w1, w2, w_enc, b_enc)

        assert out.shape == (B, C, H, W)
        err = float(jnp.max(jnp.abs(out - ref)))
        assert jnp.allclose(out, ref, atol=1e-4, rtol=1e-4), (shape, two_pass, err)

    print("KERNEL_OK")
</pallas_src>

<mosaic_0001>
module attributes {stable_mosaic.version = 11 : i64} {
  func.func @_waveletatt_kernel(%arg0: i32, %arg1: memref<256x4xf32, #tpu.memory_space<vmem>>, %arg2: memref<32x256xf32, #tpu.memory_space<vmem>>, %arg3: memref<8x4xf32, #tpu.memory_space<vmem>>, %arg4: memref<4x8xf32, #tpu.memory_space<vmem>>, %arg5: memref<1x1xf32, #tpu.memory_space<vmem>>, %arg6: memref<32x1xf32, #tpu.memory_space<vmem>>, %arg7: memref<32x4xf32, #tpu.memory_space<vmem>>, %arg8: memref<4x32xf32, #tpu.memory_space<vmem>>, %arg9: memref<32x8xf32, #tpu.memory_space<vmem>>, %arg10: memref<32x256xf32, #tpu.memory_space<vmem>>) attributes {dimension_semantics = [#tpu.dimension_semantics<parallel>], iteration_bounds = array<i64: 1>, scalar_prefetch = 0 : i64, scratch_operands = 0 : i64, tpu.core_type = #tpu.core_type<tc>, window_params = [{pipeline_mode = #tpu.pipeline_mode<synchronous>, transform_indices = @transform_0, window_bounds = array<i64: 256, 4>}, {transform_indices = @transform_1, window_bounds = array<i64: 32, 256>}, {pipeline_mode = #tpu.pipeline_mode<synchronous>, transform_indices = @transform_2, window_bounds = array<i64: 8, 4>}, {pipeline_mode = #tpu.pipeline_mode<synchronous>, transform_indices = @transform_3, window_bounds = array<i64: 4, 8>}, {pipeline_mode = #tpu.pipeline_mode<synchronous>, transform_indices = @transform_4, window_bounds = array<i64: 1, 1>}, {pipeline_mode = #tpu.pipeline_mode<synchronous>, transform_indices = @transform_5, window_bounds = array<i64: 32, 1>}, {pipeline_mode = #tpu.pipeline_mode<synchronous>, transform_indices = @transform_6, window_bounds = array<i64: 32, 4>}, {pipeline_mode = #tpu.pipeline_mode<synchronous>, transform_indices = @transform_7, window_bounds = array<i64: 4, 32>}, {pipeline_mode = #tpu.pipeline_mode<synchronous>, transform_indices = @transform_8, window_bounds = array<i64: 32, 8>}, {transform_indices = @transform_9, window_bounds = array<i64: 32, 256>}]} {
    %c0 = arith.constant 0 : index
    %c0_0 = arith.constant 0 : index
    %0 = vector.load %arg2[%c0, %c0_0] : memref<32x256xf32, #tpu.memory_space<vmem>>, vector<32x256xf32>
    %c0_1 = arith.constant 0 : index
    %c0_2 = arith.constant 0 : index
    %1 = vector.load %arg1[%c0_1, %c0_2] : memref<256x4xf32, #tpu.memory_space<vmem>>, vector<256x4xf32>
    %cst = arith.constant dense<0.000000e+00> : vector<32x4xf32>
    %2 = tpu.matmul %0, %1, %cst {dimension_numbers = #tpu.dot_dimension_numbers<[1], [0], [0], [1], [0, 0, 1, 1], [], []>} : vector<32x256xf32>, vector<256x4xf32>, vector<32x4xf32> -> vector<32x4xf32>
    %cst_3 = arith.constant 7.812500e-03 : f32
    %3 = vector.broadcast %cst_3 : f32 to vector<32x4xf32>
    %4 = arith.mulf %2, %3 : vector<32x4xf32>
    %c0_4 = arith.constant 0 : index
    %c0_5 = arith.constant 0 : index
    %5 = vector.load %arg7[%c0_4, %c0_5] : memref<32x4xf32, #tpu.memory_space<vmem>>, vector<32x4xf32>
    %c0_6 = arith.constant 0 : index
    %c0_7 = arith.constant 0 : index
    %6 = vector.load %arg8[%c0_6, %c0_7] : memref<4x32xf32, #tpu.memory_space<vmem>>, vector<4x32xf32>
    %c0_8 = arith.constant 0 : index
    %c0_9 = arith.constant 0 : index
    %7 = vector.load %arg9[%c0_8, %c0_9] : memref<32x8xf32, #tpu.memory_space<vmem>>, vector<32x8xf32>
    %c0_10 = arith.constant 0 : index
    %c0_11 = arith.constant 0 : index
    %8 = vector.load %arg6[%c0_10, %c0_11] : memref<32x1xf32, #tpu.memory_space<vmem>>, vector<32x1xf32>
    %9 = vector.broadcast %8 : vector<32x1xf32> to vector<32x4xf32>
    %10 = arith.mulf %4, %9 : vector<32x4xf32>
    %cst_12 = arith.constant dense<0.000000e+00> : vector<4x4xf32>
    %11 = tpu.matmul %6, %10, %cst_12 {dimension_numbers = #tpu.dot_dimension_numbers<[1], [0], [0], [1], [0, 0, 1, 1], [], []>} : vector<4x32xf32>, vector<32x4xf32>, vector<4x4xf32> -> vector<4x4xf32>
    %c0_13 = arith.constant 0 : index
    %c0_14 = arith.constant 0 : index
    %12 = vector.load %arg5[%c0_13, %c0_14] : memref<1x1xf32, #tpu.memory_space<vmem>>, vector<1x1xf32>
    %13 = vector.broadcast %12 : vector<1x1xf32> to vector<4x4xf32>
    %14 = arith.addf %11, %13 : vector<4x4xf32>
    %15 = tpu.iota {dimensions = array<i32: 1>} : vector<4x4xi32>
    %cst_15 = arith.constant dense<0xFF800000> : vector<4xf32>
    %16 = vector.multi_reduction <maximumf>, %14, %cst_15 [1] : vector<4x4xf32> to vector<4xf32>
    %17 = vector.shape_cast %16 : vector<4xf32> to vector<4x1xf32>
    %18 = vector.broadcast %17 : vector<4x1xf32> to vector<4x4xf32>
    %19 = arith.cmpf oeq, %14, %18 : vector<4x4xf32>
    %c4_i32 = arith.constant 4 : i32
    %20 = vector.broadcast %c4_i32 : i32 to vector<4x4xi32>
    %21 = arith.select %19, %15, %20 : vector<4x4xi1>, vector<4x4xi32>
    %cst_16 = arith.constant dense<2147483647> : vector<4xi32>
    %22 = vector.multi_reduction <minsi>, %21, %cst_16 [1] : vector<4x4xi32> to vector<4xi32>
    %23 = vector.shape_cast %22 : vector<4xi32> to vector<4x1xi32>
    %24 = vector.broadcast %23 : vector<4x1xi32> to vector<4x4xi32>
    %25 = arith.cmpi eq, %15, %24 : vector<4x4xi32>
    %26 = arith.extui %25 : vector<4x4xi1> to vector<4x4xi32>
    %27 = arith.sitofp %26 : vector<4x4xi32> to vector<4x4xf32>
    %cst_17 = arith.constant dense<0.000000e+00> : vector<32x4xf32>
    %28 = tpu.matmul %5, %27, %cst_17 {dimension_numbers = #tpu.dot_dimension_numbers<[1], [0], [0], [1], [0, 0, 1, 1], [], []>} : vector<32x4xf32>, vector<4x4xf32>, vector<32x4xf32> -> vector<32x4xf32>
    %29 = arith.mulf %4, %28 : vector<32x4xf32>
    %cst_18 = arith.constant dense<0.000000e+00> : vector<32xf32>
    %30 = vector.multi_reduction <add>, %29, %cst_18 [1] : vector<32x4xf32> to vector<32xf32>
    %31 = vector.shape_cast %30 : vector<32xf32> to vector<32x1xf32>
    %32 = vector.broadcast %31 : vector<32x1xf32> to vector<32x4xf32>
    %33 = arith.subf %4, %32 : vector<32x4xf32>
    %cst_19 = arith.constant 0.000000e+00 : f32
    %34 = vector.broadcast %cst_19 : f32 to vector<32x4xf32>
    %35 = arith.maximumf %33, %34 : vector<32x4xf32>
    %cst_20 = arith.constant dense<0.000000e+00> : vector<32xf32>
    %36 = vector.multi_reduction <add>, %35, %cst_20 [1] : vector<32x4xf32> to vector<32xf32>
    %37 = vector.shape_cast %36 : vector<32xf32> to vector<32x1xf32>
    %38 = vector.broadcast %37 : vector<32x1xf32> to vector<32x8xf32>
    %39 = arith.mulf %7, %38 : vector<32x8xf32>
    %cst_21 = arith.constant dense<0.000000e+00> : vector<4x8xf32>
    %40 = tpu.matmul %6, %39, %cst_21 {dimension_numbers = #tpu.dot_dimension_numbers<[1], [0], [0], [1], [0, 0, 1, 1], [], []>} : vector<4x32xf32>, vector<32x8xf32>, vector<4x8xf32> -> vector<4x8xf32>
    %c0_22 = arith.constant 0 : index
    %c0_23 = arith.constant 0 : index
    %41 = vector.load %arg3[%c0_22, %c0_23] : memref<8x4xf32, #tpu.memory_space<vmem>>, vector<8x4xf32>
    %cst_24 = arith.constant dense<0.000000e+00> : vector<4x4xf32>
    %42 = tpu.matmul %40, %41, %cst_24 {dimension_numbers = #tpu.dot_dimension_numbers<[1], [0], [0], [1], [0, 0, 1, 1], [], []>} : vector<4x8xf32>, vector<8x4xf32>, vector<4x4xf32> -> vector<4x4xf32>
    %cst_25 = arith.constant 0.000000e+00 : f32
    %43 = vector.broadcast %cst_25 : f32 to vector<4x4xf32>
    %44 = arith.maximumf %42, %43 : vector<4x4xf32>
    %c0_26 = arith.constant 0 : index
    %c0_27 = arith.constant 0 : index
    %45 = vector.load %arg4[%c0_26, %c0_27] : memref<4x8xf32, #tpu.memory_space<vmem>>, vector<4x8xf32>
    %cst_28 = arith.constant dense<0.000000e+00> : vector<4x8xf32>
    %46 = tpu.matmul %44, %45, %cst_28 {dimension_numbers = #tpu.dot_dimension_numbers<[1], [0], [0], [1], [0, 0, 1, 1], [], []>} : vector<4x4xf32>, vector<4x8xf32>, vector<4x8xf32> -> vector<4x8xf32>
    %47 = arith.negf %46 : vector<4x8xf32>
    %48 = math.exp %47 : vector<4x8xf32>
    %cst_29 = arith.constant 1.000000e+00 : f32
    %49 = vector.broadcast %cst_29 : f32 to vector<4x8xf32>
    %50 = arith.addf %49, %48 : vector<4x8xf32>
    %51 = arith.divf %49, %50 : vector<4x8xf32>
    %cst_30 = arith.constant dense<0.000000e+00> : vector<32x8xf32>
    %52 = tpu.matmul %5, %51, %cst_30 {dimension_numbers = #tpu.dot_dimension_numbers<[1], [0], [0], [1], [0, 0, 1, 1], [], []>} : vector<32x4xf32>, vector<4x8xf32>, vector<32x8xf32> -> vector<32x8xf32>
    %53 = arith.mulf %52, %7 : vector<32x8xf32>
    %cst_31 = arith.constant dense<0.000000e+00> : vector<32xf32>
    %54 = vector.multi_reduction <add>, %53, %cst_31 [1] : vector<32x8xf32> to vector<32xf32>
    %55 = vector.shape_cast %54 : vector<32xf32> to vector<32x1xf32>
    %56 = vector.broadcast %55 : vector<32x1xf32> to vector<32x256xf32>
    %57 = arith.mulf %0, %56 : vector<32x256xf32>
    %c0_32 = arith.constant 0 : index
    %c0_33 = arith.constant 0 : index
    %58 = vector.load %arg10[%c0_32, %c0_33] : memref<32x256xf32, #tpu.memory_space<vmem>>, vector<32x256xf32>
    tpu.vector_store %arg10[%c0_32, %c0_33], %57 {strides = array<i32>} : memref<32x256xf32, #tpu.memory_space<vmem>>, vector<32x256xf32>,
    return
  }
  func.func @transform_0(%arg0: i32) -> (i32, i32) {
    %c0_i32 = arith.constant 0 : i32
    %c0_i32_0 = arith.constant 0 : i32
    %c0_i32_1 = arith.constant 0 : i32
    return %c0_i32, %c0_i32_0 : i32, i32
  }
  func.func @transform_1(%arg0: i32) -> (i32, i32) {
    %c0_i32 = arith.constant 0 : i32
    %c0_i32_0 = arith.constant 0 : i32
    return %arg0, %c0_i32 : i32, i32
  }
  func.func @transform_2(%arg0: i32) -> (i32, i32) {
    %c0_i32 = arith.constant 0 : i32
    %c0_i32_0 = arith.constant 0 : i32
    %c0_i32_1 = arith.constant 0 : i32
    return %c0_i32, %c0_i32_0 : i32, i32
  }
  func.func @transform_3(%arg0: i32) -> (i32, i32) {
    %c0_i32 = arith.constant 0 : i32
    %c0_i32_0 = arith.constant 0 : i32
    %c0_i32_1 = arith.constant 0 : i32
    return %c0_i32, %c0_i32_0 : i32, i32
  }
  func.func @transform_4(%arg0: i32) -> (i32, i32) {
    %c0_i32 = arith.constant 0 : i32
    %c0_i32_0 = arith.constant 0 : i32
    %c0_i32_1 = arith.constant 0 : i32
    return %c0_i32, %c0_i32_0 : i32, i32
  }
  func.func @transform_5(%arg0: i32) -> (i32, i32) {
    %c0_i32 = arith.constant 0 : i32
    %c0_i32_0 = arith.constant 0 : i32
    %c0_i32_1 = arith.constant 0 : i32
    return %c0_i32, %c0_i32_0 : i32, i32
  }
  func.func @transform_6(%arg0: i32) -> (i32, i32) {
    %c0_i32 = arith.constant 0 : i32
    %c0_i32_0 = arith.constant 0 : i32
    %c0_i32_1 = arith.constant 0 : i32
    return %c0_i32, %c0_i32_0 : i32, i32
  }
  func.func @transform_7(%arg0: i32) -> (i32, i32) {
    %c0_i32 = arith.constant 0 : i32
    %c0_i32_0 = arith.constant 0 : i32
    %c0_i32_1 = arith.constant 0 : i32
    return %c0_i32, %c0_i32_0 : i32, i32
  }
  func.func @transform_8(%arg0: i32) -> (i32, i32) {
    %c0_i32 = arith.constant 0 : i32
    %c0_i32_0 = arith.constant 0 : i32
    %c0_i32_1 = arith.constant 0 : i32
    return %c0_i32, %c0_i32_0 : i32, i32
  }
  func.func @transform_9(%arg0: i32) -> (i32, i32) {
    %c0_i32 = arith.constant 0 : i32
    %c0_i32_0 = arith.constant 0 : i32
    return %arg0, %c0_i32 : i32, i32
  }
}

module attributes {stable_mosaic.version = 11 : i64} {
  func.func @_waveletatt_kernel(%arg0: i32, %arg1: memref<256x4xf32, #tpu.memory_space<vmem>>, %arg2: memref<32x256xf32, #tpu.memory_space<vmem>>, %arg3: memref<8x4xf32, #tpu.memory_space<vmem>>, %arg4: memref<4x8xf32, #tpu.memory_space<vmem>>, %arg5: memref<1x1xf32, #tpu.memory_space<vmem>>, %arg6: memref<32x1xf32, #tpu.memory_space<vmem>>, %arg7: memref<32x4xf32, #tpu.memory_space<vmem>>, %arg8: memref<4x32xf32, #tpu.memory_space<vmem>>, %arg9: memref<32x8xf32, #tpu.memory_space<vmem>>, %arg10: memref<32x256xf32, #tpu.memory_space<vmem>>) attributes {dimension_semantics = [#tpu.dimension_semantics<parallel>], iteration_bounds = array<i64: 1>, scalar_prefetch = 0 : i64, scratch_operands = 0 : i64, tpu.core_type = #tpu.core_type<tc>, window_params = [{pipeline_mode = #tpu.pipeline_mode<synchronous>, transform_indices = @transform_0, window_bounds = array<i64: 256, 4>}, {transform_indices = @transform_1, window_bounds = array<i64: 32, 256>}, {pipeline_mode = #tpu.pipeline_mode<synchronous>, transform_indices = @transform_2, window_bounds = array<i64: 8, 4>}, {pipeline_mode = #tpu.pipeline_mode<synchronous>, transform_indices = @transform_3, window_bounds = array<i64: 4, 8>}, {pipeline_mode = #tpu.pipeline_mode<synchronous>, transform_indices = @transform_4, window_bounds = array<i64: 1, 1>}, {pipeline_mode = #tpu.pipeline_mode<synchronous>, transform_indices = @transform_5, window_bounds = array<i64: 32, 1>}, {pipeline_mode = #tpu.pipeline_mode<synchronous>, transform_indices = @transform_6, window_bounds = array<i64: 32, 4>}, {pipeline_mode = #tpu.pipeline_mode<synchronous>, transform_indices = @transform_7, window_bounds = array<i64: 4, 32>}, {pipeline_mode = #tpu.pipeline_mode<synchronous>, transform_indices = @transform_8, window_bounds = array<i64: 32, 8>}, {transform_indices = @transform_9, window_bounds = array<i64: 32, 256>}]} {
    %c0 = arith.constant 0 : index
    %c0_0 = arith.constant 0 : index
    %0 = vector.load %arg2[%c0, %c0_0] : memref<32x256xf32, #tpu.memory_space<vmem>>, vector<32x256xf32>
    %c0_1 = arith.constant 0 : index
    %c0_2 = arith.constant 0 : index
    %1 = vector.load %arg1[%c0_1, %c0_2] : memref<256x4xf32, #tpu.memory_space<vmem>>, vector<256x4xf32>
    %cst = arith.constant dense<0.000000e+00> : vector<32x4xf32>
    %2 = tpu.matmul %0, %1, %cst {dimension_numbers = #tpu.dot_dimension_numbers<[1], [0], [0], [1], [0, 0, 1, 1], [], []>} : vector<32x256xf32>, vector<256x4xf32>, vector<32x4xf32> -> vector<32x4xf32>
    %cst_3 = arith.constant 7.812500e-03 : f32
    %3 = vector.broadcast %cst_3 : f32 to vector<32x4xf32>
    %4 = arith.mulf %2, %3 : vector<32x4xf32>
    %c0_4 = arith.constant 0 : index
    %c0_5 = arith.constant 0 : index
    %5 = vector.load %arg7[%c0_4, %c0_5] : memref<32x4xf32, #tpu.memory_space<vmem>>, vector<32x4xf32>
    %c0_6 = arith.constant 0 : index
    %c0_7 = arith.constant 0 : index
    %6 = vector.load %arg8[%c0_6, %c0_7] : memref<4x32xf32, #tpu.memory_space<vmem>>, vector<4x32xf32>
    %c0_8 = arith.constant 0 : index
    %c0_9 = arith.constant 0 : index
    %7 = vector.load %arg9[%c0_8, %c0_9] : memref<32x8xf32, #tpu.memory_space<vmem>>, vector<32x8xf32>
    %c0_10 = arith.constant 0 : index
    %c0_11 = arith.constant 0 : index
    %8 = vector.load %arg6[%c0_10, %c0_11] : memref<32x1xf32, #tpu.memory_space<vmem>>, vector<32x1xf32>
    %9 = vector.broadcast %8 : vector<32x1xf32> to vector<32x4xf32>
    %10 = arith.mulf %4, %9 : vector<32x4xf32>
    %cst_12 = arith.constant dense<0.000000e+00> : vector<4x4xf32>
    %11 = tpu.matmul %6, %10, %cst_12 {dimension_numbers = #tpu.dot_dimension_numbers<[1], [0], [0], [1], [0, 0, 1, 1], [], []>} : vector<4x32xf32>, vector<32x4xf32>, vector<4x4xf32> -> vector<4x4xf32>
    %c0_13 = arith.constant 0 : index
    %c0_14 = arith.constant 0 : index
    %12 = vector.load %arg5[%c0_13, %c0_14] : memref<1x1xf32, #tpu.memory_space<vmem>>, vector<1x1xf32>
    %13 = vector.broadcast %12 : vector<1x1xf32> to vector<4x4xf32>
    %14 = arith.addf %11, %13 : vector<4x4xf32>
    %15 = tpu.iota {dimensions = array<i32: 1>} : vector<4x4xi32>
    %cst_15 = arith.constant dense<0xFF800000> : vector<4xf32>
    %16 = vector.multi_reduction <maximumf>, %14, %cst_15 [1] : vector<4x4xf32> to vector<4xf32>
    %17 = vector.shape_cast %16 : vector<4xf32> to vector<4x1xf32>
    %18 = vector.broadcast %17 : vector<4x1xf32> to vector<4x4xf32>
    %19 = arith.cmpf oeq, %14, %18 : vector<4x4xf32>
    %c4_i32 = arith.constant 4 : i32
    %20 = vector.broadcast %c4_i32 : i32 to vector<4x4xi32>
    %21 = arith.select %19, %15, %20 : vector<4x4xi1>, vector<4x4xi32>
    %cst_16 = arith.constant dense<2147483647> : vector<4xi32>
    %22 = vector.multi_reduction <minsi>, %21, %cst_16 [1] : vector<4x4xi32> to vector<4xi32>
    %23 = vector.shape_cast %22 : vector<4xi32> to vector<4x1xi32>
    %24 = vector.broadcast %23 : vector<4x1xi32> to vector<4x4xi32>
    %25 = arith.cmpi eq, %15, %24 : vector<4x4xi32>
    %26 = arith.extui %25 : vector<4x4xi1> to vector<4x4xi32>
    %27 = arith.sitofp %26 : vector<4x4xi32> to vector<4x4xf32>
    %cst_17 = arith.constant dense<0.000000e+00> : vector<32x4xf32>
    %28 = tpu.matmul %5, %27, %cst_17 {dimension_numbers = #tpu.dot_dimension_numbers<[1], [0], [0], [1], [0, 0, 1, 1], [], []>} : vector<32x4xf32>, vector<4x4xf32>, vector<32x4xf32> -> vector<32x4xf32>
    %29 = arith.mulf %4, %28 : vector<32x4xf32>
    %cst_18 = arith.constant dense<0.000000e+00> : vector<32xf32>
    %30 = vector.multi_reduction <add>, %29, %cst_18 [1] : vector<32x4xf32> to vector<32xf32>
    %31 = vector.shape_cast %30 : vector<32xf32> to vector<32x1xf32>
    %32 = vector.broadcast %31 : vector<32x1xf32> to vector<32x4xf32>
    %33 = arith.subf %4, %32 : vector<32x4xf32>
    %cst_19 = arith.constant 0.000000e+00 : f32
    %34 = vector.broadcast %cst_19 : f32 to vector<32x4xf32>
    %35 = arith.maximumf %33, %34 : vector<32x4xf32>
    %cst_20 = arith.constant dense<0.000000e+00> : vector<32xf32>
    %36 = vector.multi_reduction <add>, %35, %cst_20 [1] : vector<32x4xf32> to vector<32xf32>
    %37 = vector.shape_cast %36 : vector<32xf32> to vector<32x1xf32>
    %38 = vector.broadcast %37 : vector<32x1xf32> to vector<32x8xf32>
    %39 = arith.mulf %7, %38 : vector<32x8xf32>
    %cst_21 = arith.constant dense<0.000000e+00> : vector<4x8xf32>
    %40 = tpu.matmul %6, %39, %cst_21 {dimension_numbers = #tpu.dot_dimension_numbers<[1], [0], [0], [1], [0, 0, 1, 1], [], []>} : vector<4x32xf32>, vector<32x8xf32>, vector<4x8xf32> -> vector<4x8xf32>
    %c0_22 = arith.constant 0 : index
    %c0_23 = arith.constant 0 : index
    %41 = vector.load %arg3[%c0_22, %c0_23] : memref<8x4xf32, #tpu.memory_space<vmem>>, vector<8x4xf32>
    %cst_24 = arith.constant dense<0.000000e+00> : vector<4x4xf32>
    %42 = tpu.matmul %40, %41, %cst_24 {dimension_numbers = #tpu.dot_dimension_numbers<[1], [0], [0], [1], [0, 0, 1, 1], [], []>} : vector<4x8xf32>, vector<8x4xf32>, vector<4x4xf32> -> vector<4x4xf32>
    %cst_25 = arith.constant 0.000000e+00 : f32
    %43 = vector.broadcast %cst_25 : f32 to vector<4x4xf32>
    %44 = arith.maximumf %42, %43 : vector<4x4xf32>
    %c0_26 = arith.constant 0 : index
    %c0_27 = arith.constant 0 : index
    %45 = vector.load %arg4[%c0_26, %c0_27] : memref<4x8xf32, #tpu.memory_space<vmem>>, vector<4x8xf32>
    %cst_28 = arith.constant dense<0.000000e+00> : vector<4x8xf32>
    %46 = tpu.matmul %44, %45, %cst_28 {dimension_numbers = #tpu.dot_dimension_numbers<[1], [0], [0], [1], [0, 0, 1, 1], [], []>} : vector<4x4xf32>, vector<4x8xf32>, vector<4x8xf32> -> vector<4x8xf32>
    %47 = arith.negf %46 : vector<4x8xf32>
    %48 = math.exp %47 : vector<4x8xf32>
    %cst_29 = arith.constant 1.000000e+00 : f32
    %49 = vector.broadcast %cst_29 : f32 to vector<4x8xf32>
    %50 = arith.addf %49, %48 : vector<4x8xf32>
    %51 = arith.divf %49, %50 : vector<4x8xf32>
    %cst_30 = arith.constant dense<0.000000e+00> : vector<32x8xf32>
    %52 = tpu.matmul %5, %51, %cst_30 {dimension_numbers = #tpu.dot_dimension_numbers<[1], [0], [0], [1], [0, 0, 1, 1], [], []>} : vector<32x4xf32>, vector<4x8xf32>, vector<32x8xf32> -> vector<32x8xf32>
    %53 = arith.mulf %52, %7 : vector<32x8xf32>
    %cst_31 = arith.constant dense<0.000000e+00> : vector<32xf32>
    %54 = vector.multi_reduction <add>, %53, %cst_31 [1] : vector<32x8xf32> to vector<32xf32>
    %55 = vector.shape_cast %54 : vector<32xf32> to vector<32x1xf32>
    %56 = vector.broadcast %55 : vector<32x1xf32> to vector<32x256xf32>
    %57 = arith.mulf %0, %56 : vector<32x256xf32>
    %c0_32 = arith.constant 0 : index
    %c0_33 = arith.constant 0 : index
    %58 = vector.load %arg10[%c0_32, %c0_33] : memref<32x256xf32, #tpu.memory_space<vmem>>, vector<32x256xf32>
    tpu.vector_store %arg10[%c0_32, %c0_33], %57 {strides = array<i32>} : memref<32x256xf32, #tpu.memory_space<vmem>>, vector<32x256xf32>,
    return
  }
  func.func @transform_0(%arg0: i32) -> (i32, i32) {
    %c0_i32 = arith.constant 0 : i32
    %c0_i32_0 = arith.constant 0 : i32
    %c0_i32_1 = arith.constant 0 : i32
    return %c0_i32, %c0_i32_0 : i32, i32
  }
  func.func @transform_1(%arg0: i32) -> (i32, i32) {
    %c0_i32 = arith.constant 0 : i32
    %c0_i32_0 = arith.constant 0 : i32
    return %arg0, %c0_i32 : i32, i32
  }
  func.func @transform_2(%arg0: i32) -> (i32, i32) {
    %c0_i32 = arith.constant 0 : i32
    %c0_i32_0 = arith.constant 0 : i32
    %c0_i32_1 = arith.constant 0 : i32
    return %c0_i32, %c0_i32_0 : i32, i32
  }
  func.func @transform_3(%arg0: i32) -> (i32, i32) {
    %c0_i32 = arith.constant 0 : i32
    %c0_i32_0 = arith.constant 0 : i32
    %c0_i32_1 = arith.constant 0 : i32
    return %c0_i32, %c0_i32_0 : i32, i32
  }
  func.func @transform_4(%arg0: i32) -> (i32, i32) {
    %c0_i32 = arith.constant 0 : i32
    %c0_i32_0 = arith.constant 0 : i32
    %c0_i32_1 = arith.constant 0 : i32
    return %c0_i32, %c0_i32_0 : i32, i32
  }
  func.func @transform_5(%arg0: i32) -> (i32, i32) {
    %c0_i32 = arith.constant 0 : i32
    %c0_i32_0 = arith.constant 0 : i32
    %c0_i32_1 = arith.constant 0 : i32
    return %c0_i32, %c0_i32_0 : i32, i32
  }
  func.func @transform_6(%arg0: i32) -> (i32, i32) {
    %c0_i32 = arith.constant 0 : i32
    %c0_i32_0 = arith.constant 0 : i32
    %c0_i32_1 = arith.constant 0 : i32
    return %c0_i32, %c0_i32_0 : i32, i32
  }
  func.func @transform_7(%arg0: i32) -> (i32, i32) {
    %c0_i32 = arith.constant 0 : i32
    %c0_i32_0 = arith.constant 0 : i32
    %c0_i32_1 = arith.constant 0 : i32
    return %c0_i32, %c0_i32_0 : i32, i32
  }
  func.func @transform_8(%arg0: i32) -> (i32, i32) {
    %c0_i32 = arith.constant 0 : i32
    %c0_i32_0 = arith.constant 0 : i32
    %c0_i32_1 = arith.constant 0 : i32
    return %c0_i32, %c0_i32_0 : i32, i32
  }
  func.func @transform_9(%arg0: i32) -> (i32, i32) {
    %c0_i32 = arith.constant 0 : i32
    %c0_i32_0 = arith.constant 0 : i32
    return %arg0, %c0_i32 : i32, i32
  }
}

</mosaic_0001>

<llo_original>
// kernel: tpu_custom_call.1
$region0: #{tpu_custom_call.1}
  #allocation0 [shape = 'u32[]', space=smem, size = 0x4, offset = 0x4, fixed_abs, tag = 'smem constant byte address 0x4 - core index']
  #allocation1 [shape = 'u32[72,128]{1,0:T(1,128)}', space=vmem, size = 0x9000, scoped, tag = 'internal scratch']
  #allocation2 [shape = 'f32[1,1]{1,0:T(1,128)S(1)}', space=vmem, size = 0x200, scoped, tag = 'scoped memory for tpu_custom_call.1']
  %s0 = inlined_call_operand.vmem [shape: f32[256,4], index: 0, kind: input, shape index: {}]
  %s1 = inlined_call_operand.vmem [shape: f32[32,256], index: 1, kind: input, shape index: {}]
  %s2 = inlined_call_operand.vmem [shape: f32[8,4], index: 2, kind: input, shape index: {}]
  %s3 = inlined_call_operand.vmem [shape: f32[4,8], index: 3, kind: input, shape index: {}]
  %s4 = inlined_call_operand.<no memory space> [shape: f32[1,1], index: 4, kind: input, shape index: {}]
  %s5 = inlined_call_operand.vmem [shape: f32[32,1], index: 5, kind: input, shape index: {}]
  %s6 = inlined_call_operand.vmem [shape: f32[32,4], index: 6, kind: input, shape index: {}]
  %s7 = inlined_call_operand.vmem [shape: f32[4,32], index: 7, kind: input, shape index: {}]
  %s8 = inlined_call_operand.vmem [shape: f32[32,8], index: 8, kind: input, shape index: {}]
  %s9 = inlined_call_operand.hbm [shape: f32[32,256], index: 9, kind: output, shape index: {}]
  %s10 = sld [smem:[#allocation0]]
  $region46: #{tpu_custom_call.1} parent=0
    _
  %s12 = ssub.s32 1, %s10
  %s13 = scalar_select 0, %s12, %s10
  %v14 = vstv %s4
  %15 = vst [vmem:[#allocation2] sm:$0x1] %v14
  $region1: #{tpu_custom_call.1} parent=0
    #allocation3 [shape = 'u8[32768]{0}', space=vmem, size = 0x8000, scoped, tag = 'output window, operand 0, single buffered']
    #allocation4 [shape = 's32[1]{0}', space=sflag, size = 0x4, scoped, tag = 'scoped memory for tpu_custom_call.1']
    %16 = vsyncpa [#allocation4], 0
    // Predicated region
    $region2: #{tpu_custom_call.1} parent=1 // pred_check
      _
    $region3: #{tpu_custom_call.1} parent=1 // pred_check_branch
      %18 = sbr.rel (0) target = $region5
    $region4: #{tpu_custom_call.1} parent=1 // pred_region
      _
    $region5: #{tpu_custom_call.1} parent=1 // pred_fallthru
      _
    // Predicated region
    $region6: #{tpu_custom_call.1} parent=1 // pred_check
      _
    $region7: #{tpu_custom_call.1} parent=1 // pred_check_branch
      %20 = sbr.rel (0) target = $region9
    $region8: #{tpu_custom_call.1} parent=1 // pred_region
      _
    $region9: #{tpu_custom_call.1} parent=1 // pred_fallthru
      _
    // Predicated region
    $region10: #{tpu_custom_call.1} parent=1 // pred_check
      _
    $region11: #{tpu_custom_call.1} parent=1 // pred_check_branch
      %22 = sbr.rel (0) target = $region13
    $region12: #{tpu_custom_call.1} parent=1 // pred_region
      _
    $region13: #{tpu_custom_call.1} parent=1 // pred_fallthru
      _
    // Predicated region
    $region14: #{tpu_custom_call.1} parent=1 // pred_check
      _
    $region15: #{tpu_custom_call.1} parent=1 // pred_check_branch
      %24 = sbr.rel (0) target = $region17
    $region16: #{tpu_custom_call.1} parent=1 // pred_region
      _
    $region17: #{tpu_custom_call.1} parent=1 // pred_fallthru
      _
    // Predicated region
    $region18: #{tpu_custom_call.1} parent=1 // pred_check
      _
    $region19: #{tpu_custom_call.1} parent=1 // pred_check_branch
      %26 = sbr.rel (0) target = $region21
    $region20: #{tpu_custom_call.1} parent=1 // pred_region
      _
    $region21: #{tpu_custom_call.1} parent=1 // pred_fallthru
      _
    // Predicated region
    $region22: #{tpu_custom_call.1} parent=1 // pred_check
      _
    $region23: #{tpu_custom_call.1} parent=1 // pred_check_branch
      %28 = sbr.rel (0) target = $region25
    $region24: #{tpu_custom_call.1} parent=1 // pred_region
      _
    $region25: #{tpu_custom_call.1} parent=1 // pred_fallthru
      _
    // Predicated region
    $region26: #{tpu_custom_call.1} parent=1 // pred_check
      _
    $region27: #{tpu_custom_call.1} parent=1 // pred_check_branch
      %30 = sbr.rel (0) target = $region29
    $region28: #{tpu_custom_call.1} parent=1 // pred_region
      _
    $region29: #{tpu_custom_call.1} parent=1 // pred_fallthru
      _
    // Predicated region
    $region30: #{tpu_custom_call.1} parent=1 // pred_check
      _
    $region31: #{tpu_custom_call.1} parent=1 // pred_check_branch
      %32 = sbr.rel (0) target = $region33
    $region32: #{tpu_custom_call.1} parent=1 // pred_region
      _
    $region33: #{tpu_custom_call.1} parent=1 // pred_fallthru
      _
    // Predicated region
    $region34: #{tpu_custom_call.1} parent=1 // pred_check
      _
    $region35: #{tpu_custom_call.1} parent=1 // pred_check_branch
      %34 = sbr.rel (0) target = $region37
    $region36: #{tpu_custom_call.1} parent=1 // pred_region
      _
    $region37: #{tpu_custom_call.1} parent=1 // pred_fallthru
      _
    %v35 = vld [vmem:[%s1] sm:$0xff]
    %v36 = vld [vmem:[%s1 + $0x8] sm:$0xff]
    %v37 = vld [vmem:[%s1 + $0x10] sm:$0xff]
    %v38 = vld [vmem:[%s1 + $0x18] sm:$0xff]
    %v39 = vld [vmem:[%s1 + $0x20] sm:$0xff]
    %v40 = vld [vmem:[%s1 + $0x28] sm:$0xff]
    %v41 = vld [vmem:[%s1 + $0x30] sm:$0xff]
    %v42 = vld [vmem:[%s1 + $0x38] sm:$0xff]
    %v43 = vld [vmem:[%s0] sm:$0xff]
    %v44 = vld [vmem:[%s0 + $0x8] sm:$0xff]
    %v45 = vld [vmem:[%s0 + $0x10] sm:$0xff]
    %v46 = vld [vmem:[%s0 + $0x18] sm:$0xff]
    %v47 = vld [vmem:[%s0 + $0x20] sm:$0xff]
    %v48 = vld [vmem:[%s0 + $0x28] sm:$0xff]
    %v49 = vld [vmem:[%s0 + $0x30] sm:$0xff]
    %v50 = vld [vmem:[%s0 + $0x38] sm:$0xff]
    %v51 = vld [vmem:[%s0 + $0x40] sm:$0xff]
    %v52 = vld [vmem:[%s0 + $0x48] sm:$0xff]
    %v53 = vld [vmem:[%s0 + $0x50] sm:$0xff]
    %v54 = vld [vmem:[%s0 + $0x58] sm:$0xff]
    %v55 = vld [vmem:[%s0 + $0x60] sm:$0xff]
    %v56 = vld [vmem:[%s0 + $0x68] sm:$0xff]
    %v57 = vld [vmem:[%s0 + $0x70] sm:$0xff]
    %v58 = vld [vmem:[%s0 + $0x78] sm:$0xff]
    %v59 = vld [vmem:[%s0 + $0x80] sm:$0xff]
    %v60 = vld [vmem:[%s0 + $0x88] sm:$0xff]
    %v61 = vld [vmem:[%s0 + $0x90] sm:$0xff]
    %v62 = vld [vmem:[%s0 + $0x98] sm:$0xff]
    %v63 = vld [vmem:[%s0 + $0xa0] sm:$0xff]
    %v64 = vld [vmem:[%s0 + $0xa8] sm:$0xff]
    %v65 = vld [vmem:[%s0 + $0xb0] sm:$0xff]
    %v66 = vld [vmem:[%s0 + $0xb8] sm:$0xff]
    %v67 = vld [vmem:[%s0 + $0xc0] sm:$0xff]
    %v68 = vld [vmem:[%s0 + $0xc8] sm:$0xff]
    %v69 = vld [vmem:[%s0 + $0xd0] sm:$0xff]
    %v70 = vld [vmem:[%s0 + $0xd8] sm:$0xff]
    %v71 = vld [vmem:[%s0 + $0xe0] sm:$0xff]
    %v72 = vld [vmem:[%s0 + $0xe8] sm:$0xff]
    %v73 = vld [vmem:[%s0 + $0xf0] sm:$0xff]
    %v74 = vld [vmem:[%s0 + $0xf8] sm:$0xff]
    %75 = vmatpush.msra.mxu0 %v58
    %76 = vmatpush.msra.mxu0 %v57
    %77 = vmatpush.msra.mxu0 %v56
    %78 = vmatpush.msra.mxu0 %v55
    %79 = vmatpush.msra.mxu0 %v54
    %80 = vmatpush.msra.mxu0 %v53
    %81 = vmatpush.msra.mxu0 %v52
    %82 = vmatpush.msra.mxu0 %v51
    %83 = vmatpush.msra.mxu0 %v50
    %84 = vmatpush.msra.mxu0 %v49
    %85 = vmatpush.msra.mxu0 %v48
    %86 = vmatpush.msra.mxu0 %v47
    %87 = vmatpush.msra.mxu0 %v46
    %88 = vmatpush.msra.mxu0 %v45
    %89 = vmatpush.msra.mxu0 %v44
    %90 = vmatpush.msra.mxu0 %v43
    %91 = vmatmul.f32.gmra.mxu0 %v35
    %v92 = vpop.f32.mrf.mxu0
    %v93 = vadd.f32 0.0, %v92
    %94 = vmatmul.f32.gmra.mxu0 %v37
    %v95 = vpop.f32.mrf.mxu0
    %v96 = vadd.f32 0.0, %v95
    %97 = vmatmul.f32.gmra.mxu0 %v39
    %v98 = vpop.f32.mrf.mxu0
    %v99 = vadd.f32 0.0, %v98
    %100 = vmatmul.f32.gmra.mxu0 %v41
    %v101 = vpop.f32.mrf.mxu0
    %v102 = vadd.f32 0.0, %v101
    %103 = vdwg.mxu0
    %104 = vmatpush.msra.mxu0 %v74
    %105 = vmatpush.msra.mxu0 %v73
    %106 = vmatpush.msra.mxu0 %v72
    %107 = vmatpush.msra.mxu0 %v71
    %108 = vmatpush.msra.mxu0 %v70
    %109 = vmatpush.msra.mxu0 %v69
    %110 = vmatpush.msra.mxu0 %v68
    %111 = vmatpush.msra.mxu0 %v67
    %112 = vmatpush.msra.mxu0 %v66
    %113 = vmatpush.msra.mxu0 %v65
    %114 = vmatpush.msra.mxu0 %v64
    %115 = vmatpush.msra.mxu0 %v63
    %116 = vmatpush.msra.mxu0 %v62
    %117 = vmatpush.msra.mxu0 %v61
    %118 = vmatpush.msra.mxu0 %v60
    %119 = vmatpush.msra.mxu0 %v59
    %120 = vmatmul.f32.gmra.mxu0 %v36
    %v121 = vpop.f32.mrf.mxu0
    %v122 = vadd.f32 %v93, %v121
    %123 = vmatmul.f32.gmra.mxu0 %v38
    %v124 = vpop.f32.mrf.mxu0
    %v125 = vadd.f32 %v96, %v124
    %126 = vmatmul.f32.gmra.mxu0 %v40
    %v127 = vpop.f32.mrf.mxu0
    %v128 = vadd.f32 %v99, %v127
    %129 = vmatmul.f32.gmra.mxu0 %v42
    %v130 = vpop.f32.mrf.mxu0
    %v131 = vadd.f32 %v102, %v130
    %132 = vdwg.mxu0
    %v133 = vmul.f32 %v122, 0.0078125
    %v134 = vmul.f32 %v125, 0.0078125
    %v135 = vmul.f32 %v128, 0.0078125
    %v136 = vmul.f32 %v131, 0.0078125
    %v137 = vld [vmem:[%s6] sm:$0xff]
    %v138 = vld [vmem:[%s6 + $0x8] sm:$0xff]
    %v139 = vld [vmem:[%s6 + $0x10] sm:$0xff]
    %v140 = vld [vmem:[%s6 + $0x18] sm:$0xff]
    %v141 = vld [vmem:[%s7] sm:$0xf]
    %v142 = vld [vmem:[%s8] sm:$0xff]
    %v143 = vld [vmem:[%s8 + $0x8] sm:$0xff]
    %v144 = vld [vmem:[%s8 + $0x10] sm:$0xff]
    %v145 = vld [vmem:[%s8 + $0x18] sm:$0xff]
    %v146 = vld [vmem:[%s5] sm:$0xff]
    %v147 = vld [vmem:[%s5 + $0x8] sm:$0xff]
    %v148 = vld [vmem:[%s5 + $0x10] sm:$0xff]
    %v149 = vld [vmem:[%s5 + $0x18] sm:$0xff]
    %151 = vset.pattern.permute.xlu0 0
    %152 = vperm.xlu0 %151, %v146
    %v153 = vpop.permute.xlu0 %152
    %156 = vset.pattern.permute.xlu0 0
    %157 = vperm.xlu0 %156, %v147
    %v158 = vpop.permute.xlu0 %157
    %161 = vset.pattern.permute.xlu0 0
    %162 = vperm.xlu0 %161, %v148
    %v163 = vpop.permute.xlu0 %162
    %166 = vset.pattern.permute.xlu0 0
    %167 = vperm.xlu0 %166, %v149
    %v168 = vpop.permute.xlu0 %167
    %v170 = vmul.f32 %v133, %v153
    %v171 = vmul.f32 %v134, %v158
    %v172 = vmul.f32 %v135, %v163
    %v173 = vmul.f32 %v136, %v168
    %v174 = vld [vmem:[#allocation2] sm:$0x1]
    %v176 = vperm.slane %v174, 0
    %177 = vset.pattern.permute.xlu0 0
    %178 = vperm.xlu0 %177, %v176
    %v179 = vpop.permute.xlu0 %178
    %vm181 = vcmask 261120
    %v183 = vsel %vm181, %v141, 0
    %185 = vmatpush.msra.mxu0 0.0
    %186 = vmatpush.msra.mxu0 0.0
    %187 = vmatpush.msra.mxu0 0.0
    %188 = vmatpush.msra.mxu0 0.0
    %189 = vmatpush.msra.mxu0 0.0
    %190 = vmatpush.msra.mxu0 0.0
    %191 = vmatpush.msra.mxu0 0.0
    %192 = vmatpush.msra.mxu0 0.0
    %193 = vmatpush.msra.mxu0 0.0
    %194 = vmatpush.msra.mxu0 0.0
    %195 = vmatpush.msra.mxu0 0.0
    %196 = vmatpush.msra.mxu0 0.0
    %197 = vmatpush.msra.mxu0 %v173
    %198 = vmatpush.msra.mxu0 %v172
    %199 = vmatpush.msra.mxu0 %v171
    %200 = vmatpush.msra.mxu0 %v170
    %201 = vmatmul.f32.gmra.mxu0 %v183
    %v202 = vpop.f32.mrf.mxu0
    %v203 = vadd.f32 %v179, %v202
    %204 = vdwg.mxu0
    %v205 = vlaneseq
    %v206 = vand.u32 %v205, 127
    %vm207 = vcmask 27648
    %v208 = vsel %vm207, %v203, -inf
    %209 = vmax.xlane.f32.xlu0 %v208
    %v210 = vpop.xlane.xlu0 %209
    %vm211 = vcmp.eq.f32.partialorder %v203, %v210
    %v212 = vsel %vm211, %v206, 4
    %v213 = vsel %vm207, %v212, 2147483647
    %v214 = vand.u32 %v213, 65535
    %v215 = vshra.s32 %v213, 16
    %v216 = vcvt.s32.f32 %v214
    %v217 = vcvt.s32.f32 %v215
    %218 = vmin.xlane.f32.xlu0 %v217
    %v219 = vpop.xlane.xlu0 %218
    %vm220 = vcmp.eq.f32.partialorder %v217, %v219
    %v221 = vsel %vm220, %v216, inf
    %222 = vmin.xlane.f32.xlu0 %v221
    %v223 = vpop.xlane.xlu0 %222
    %v224 = vcvt.f32.s32 %v223
    %v225 = vcvt.f32.s32 %v219
    %v226 = vshll.u32 %v225, 16
    %v227 = vadd.s32 %v226, %v224
    %vm228 = vcmp.eq.s32.totalorder %v206, %v227
    %v229 = vsel %vm228, 1, 0
    %v230 = vcvt.s32.f32 %v229
    %vm231 = vcmask 31744
    %v233 = vsel %vm231, %v137, 0
    %v236 = vsel %vm231, %v138, 0
    %v239 = vsel %vm231, %v139, 0
    %v242 = vsel %vm231, %v140, 0
    %vm244 = vcmask 1043456
    %v246 = vsel %vm244, %v230, 0
    %248 = vmatpush.msra.mxu0 0.0
    %249 = vmatpush.msra.mxu0 0.0
    %250 = vmatpush.msra.mxu0 0.0
    %251 = vmatpush.msra.mxu0 0.0
    %252 = vmatpush.msra.mxu0 0.0
    %253 = vmatpush.msra.mxu0 0.0
    %254 = vmatpush.msra.mxu0 0.0
    %255 = vmatpush.msra.mxu0 0.0
    %256 = vmatpush.msra.mxu0 0.0
    %257 = vmatpush.msra.mxu0 0.0
    %258 = vmatpush.msra.mxu0 0.0
    %259 = vmatpush.msra.mxu0 0.0
    %260 = vmatpush.msra.mxu0 0.0
    %261 = vmatpush.msra.mxu0 0.0
    %262 = vmatpush.msra.mxu0 0.0
    %263 = vmatpush.msra.mxu0 %v246
    %264 = vmatmul.f32.gmra.mxu0 %v233
    %v265 = vpop.f32.mrf.mxu0
    %v266 = vadd.f32 0.0, %v265
    %267 = vmatmul.f32.gmra.mxu0 %v236
    %v268 = vpop.f32.mrf.mxu0
    %v269 = vadd.f32 0.0, %v268
    %270 = vmatmul.f32.gmra.mxu0 %v239
    %v271 = vpop.f32.mrf.mxu0
    %v272 = vadd.f32 0.0, %v271
    %273 = vmatmul.f32.gmra.mxu0 %v242
    %v274 = vpop.f32.mrf.mxu0
    %v275 = vadd.f32 0.0, %v274
    %276 = vdwg.mxu0
    %v277 = vmul.f32 %v133, %v266
    %v278 = vmul.f32 %v134, %v269
    %v279 = vmul.f32 %v135, %v272
    %v280 = vmul.f32 %v136, %v275
    %v281 = vsel %vm231, %v277, 0.0
    %282 = vadd.xlane.f32.xlu0 %v281
    %v283 = vpop.xlane.xlu0 %282
    %v284 = vsel %vm231, %v278, 0.0
    %285 = vadd.xlane.f32.xlu0 %v284
    %v286 = vpop.xlane.xlu0 %285
    %v287 = vsel %vm231, %v279, 0.0
    %288 = vadd.xlane.f32.xlu0 %v287
    %v289 = vpop.xlane.xlu0 %288
    %v290 = vsel %vm231, %v280, 0.0
    %291 = vadd.xlane.f32.xlu0 %v290
    %v292 = vpop.xlane.xlu0 %291
    %v293 = vsub.f32 %v133, %v283
    %v294 = vsub.f32 %v134, %v286
    %v295 = vsub.f32 %v135, %v289
    %v296 = vsub.f32 %v136, %v292
    %v297 = vmax.f32 %v293, 0.0
    %v298 = vmax.f32 %v294, 0.0
    %v299 = vmax.f32 %v295, 0.0
    %v300 = vmax.f32 %v296, 0.0
    %v301 = vsel %vm231, %v297, 0.0
    %302 = vadd.xlane.f32.xlu0 %v301
    %v303 = vpop.xlane.xlu0 %302
    %v304 = vsel %vm231, %v298, 0.0
    %305 = vadd.xlane.f32.xlu0 %v304
    %v306 = vpop.xlane.xlu0 %305
    %v307 = vsel %vm231, %v299, 0.0
    %308 = vadd.xlane.f32.xlu0 %v307
    %v309 = vpop.xlane.xlu0 %308
    %v310 = vsel %vm231, %v300, 0.0
    %311 = vadd.xlane.f32.xlu0 %v310
    %v312 = vpop.xlane.xlu0 %311
    %v313 = vmul.f32 %v142, %v303
    %v314 = vmul.f32 %v143, %v306
    %v315 = vmul.f32 %v144, %v309
    %v316 = vmul.f32 %v145, %v312
    %317 = vmatpush.msra.mxu0 0.0
    %318 = vmatpush.msra.mxu0 0.0
    %319 = vmatpush.msra.mxu0 0.0
    %320 = vmatpush.msra.mxu0 0.0
    %321 = vmatpush.msra.mxu0 0.0
    %322 = vmatpush.msra.mxu0 0.0
    %323 = vmatpush.msra.mxu0 0.0
    %324 = vmatpush.msra.mxu0 0.0
    %325 = vmatpush.msra.mxu0 0.0
    %326 = vmatpush.msra.mxu0 0.0
    %327 = vmatpush.msra.mxu0 0.0
    %328 = vmatpush.msra.mxu0 0.0
    %329 = vmatpush.msra.mxu0 %v316
    %330 = vmatpush.msra.mxu0 %v315
    %331 = vmatpush.msra.mxu0 %v314
    %332 = vmatpush.msra.mxu0 %v313
    %333 = vmatmul.f32.gmra.mxu0 %v183
    %v334 = vpop.f32.mrf.mxu0
    %v335 = vadd.f32 0.0, %v334
    %336 = vdwg.mxu0
    %v337 = vld [vmem:[%s2] sm:$0xff]
    %vm338 = vcmask 64512
    %v340 = vsel %vm338, %v335, 0
    %342 = vmatpush.msra.mxu0 0.0
    %343 = vmatpush.msra.mxu0 0.0
    %344 = vmatpush.msra.mxu0 0.0
    %345 = vmatpush.msra.mxu0 0.0
    %346 = vmatpush.msra.mxu0 0.0
    %347 = vmatpush.msra.mxu0 0.0
    %348 = vmatpush.msra.mxu0 0.0
    %349 = vmatpush.msra.mxu0 0.0
    %350 = vmatpush.msra.mxu0 0.0
    %351 = vmatpush.msra.mxu0 0.0
    %352 = vmatpush.msra.mxu0 0.0
    %353 = vmatpush.msra.mxu0 0.0
    %354 = vmatpush.msra.mxu0 0.0
    %355 = vmatpush.msra.mxu0 0.0
    %356 = vmatpush.msra.mxu0 0.0
    %357 = vmatpush.msra.mxu0 %v337
    %358 = vmatmul.f32.gmra.mxu0 %v340
    %v359 = vpop.f32.mrf.mxu0
    %v360 = vadd.f32 0.0, %v359
    %361 = vdwg.mxu0
    %v362 = vmax.f32 %v360, 0.0
    %v363 = vld [vmem:[%s3] sm:$0xf]
    %v365 = vsel %vm231, %v362, 0
    %v368 = vsel %vm244, %v363, 0
    %370 = vmatpush.msra.mxu0 0.0
    %371 = vmatpush.msra.mxu0 0.0
    %372 = vmatpush.msra.mxu0 0.0
    %373 = vmatpush.msra.mxu0 0.0
    %374 = vmatpush.msra.mxu0 0.0
    %375 = vmatpush.msra.mxu0 0.0
    %376 = vmatpush.msra.mxu0 0.0
    %377 = vmatpush.msra.mxu0 0.0
    %378 = vmatpush.msra.mxu0 0.0
    %379 = vmatpush.msra.mxu0 0.0
    %380 = vmatpush.msra.mxu0 0.0
    %381 = vmatpush.msra.mxu0 0.0
    %382 = vmatpush.msra.mxu0 0.0
    %383 = vmatpush.msra.mxu0 0.0
    %384 = vmatpush.msra.mxu0 0.0
    %385 = vmatpush.msra.mxu0 %v368
    %386 = vmatmul.f32.gmra.mxu0 %v365
    %v387 = vpop.f32.mrf.mxu0
    %v388 = vadd.f32 0.0, %v387
    %389 = vdwg.mxu0
    %v390 = vxor.u32 %v388, 2147483648
    %v391 = vmul.f32 %v390, 1.442695
    %v392 = vpow.pop %v391
    %v393 = vadd.f32 %v392, 1.0
    %v394 = vrcp.pop %v393
    %v395 = vmul.f32 %v393, %v394
    %v396 = vsub.f32 1.0, %v395
    %v397 = vmul.f32 %v394, %v396
    %v398 = vadd.f32 %v394, %v397
    %vm399 = vweird.f32 %v393
    %vm400 = vweird.f32 %v394
    %vm401 = vmor %vm399, %vm400
    %v402 = vsel %vm401, %v394, %v398
    %v403 = vand.u32 2147483647, %v393
    %vm404 = vcmp.eq.f32.partialorder %v403, 8.507059e+37
    %v405 = vand.u32 %v393, 2147483648
    %v406 = vor.u32 1.1754944e-38, %v405
    %v407 = vsel %vm404, %v406, %v402
    %v408 = vmul.f32 1.0, %v407
    %v410 = vsel %vm244, %v408, 0
    %412 = vmatpush.msra.mxu0 0.0
    %413 = vmatpush.msra.mxu0 0.0
    %414 = vmatpush.msra.mxu0 0.0
    %415 = vmatpush.msra.mxu0 0.0
    %416 = vmatpush.msra.mxu0 0.0
    %417 = vmatpush.msra.mxu0 0.0
    %418 = vmatpush.msra.mxu0 0.0
    %419 = vmatpush.msra.mxu0 0.0
    %420 = vmatpush.msra.mxu0 0.0
    %421 = vmatpush.msra.mxu0 0.0
    %422 = vmatpush.msra.mxu0 0.0
    %423 = vmatpush.msra.mxu0 0.0
    %424 = vmatpush.msra.mxu0 0.0
    %425 = vmatpush.msra.mxu0 0.0
    %426 = vmatpush.msra.mxu0 0.0
    %427 = vmatpush.msra.mxu0 %v410
    %428 = vmatmul.f32.gmra.mxu0 %v233
    %v429 = vpop.f32.mrf.mxu0
    %v430 = vadd.f32 0.0, %v429
    %431 = vmatmul.f32.gmra.mxu0 %v236
    %v432 = vpop.f32.mrf.mxu0
    %v433 = vadd.f32 0.0, %v432
    %434 = vmatmul.f32.gmra.mxu0 %v239
    %v435 = vpop.f32.mrf.mxu0
    %v436 = vadd.f32 0.0, %v435
    %437 = vmatmul.f32.gmra.mxu0 %v242
    %v438 = vpop.f32.mrf.mxu0
    %v439 = vadd.f32 0.0, %v438
    %440 = vdwg.mxu0
    %v441 = vmul.f32 %v430, %v142
    %v442 = vmul.f32 %v433, %v143
    %v443 = vmul.f32 %v436, %v144
    %v444 = vmul.f32 %v439, %v145
    %v445 = vsel %vm338, %v441, 0.0
    %446 = vadd.xlane.f32.xlu0 %v445
    %v447 = vpop.xlane.xlu0 %446
    %v448 = vsel %vm338, %v442, 0.0
    %449 = vadd.xlane.f32.xlu0 %v448
    %v450 = vpop.xlane.xlu0 %449
    %v451 = vsel %vm338, %v443, 0.0
    %452 = vadd.xlane.f32.xlu0 %v451
    %v453 = vpop.xlane.xlu0 %452
    %v454 = vsel %vm338, %v444, 0.0
    %455 = vadd.xlane.f32.xlu0 %v454
    %v456 = vpop.xlane.xlu0 %455
    %v457 = vmul.f32 %v35, %v447
    %v458 = vmul.f32 %v36, %v447
    %v459 = vmul.f32 %v37, %v450
    %v460 = vmul.f32 %v38, %v450
    %v461 = vmul.f32 %v39, %v453
    %v462 = vmul.f32 %v40, %v453
    %v463 = vmul.f32 %v41, %v456
    %v464 = vmul.f32 %v42, %v456
    %465 = vst [vmem:[#allocation3] sm:$0xff] %v457
    %466 = vst [vmem:[#allocation3 + $0x8] sm:$0xff] %v458
    %467 = vst [vmem:[#allocation3 + $0x10] sm:$0xff] %v459
    %468 = vst [vmem:[#allocation3 + $0x18] sm:$0xff] %v460
    %469 = vst [vmem:[#allocation3 + $0x20] sm:$0xff] %v461
    %470 = vst [vmem:[#allocation3 + $0x28] sm:$0xff] %v462
    %471 = vst [vmem:[#allocation3 + $0x30] sm:$0xff] %v463
    %472 = vst [vmem:[#allocation3 + $0x38] sm:$0xff] %v464
    // Predicated region
    $region38: #{tpu_custom_call.1} parent=1 // pred_check
      _
    $region39: #{tpu_custom_call.1} parent=1 // pred_check_branch
      %474 = sbr.rel (0) target = $region41
    $region40: #{tpu_custom_call.1} parent=1 // pred_region
      %476 = vsyncadd [#allocation4], 0
      %s477 = sshll.u32 [#allocation3], 4
      %s478 = int_to_ptr.vmem [resolvable:$true] %s477
      %s479 = sshll.u32 %s9, 4
      %s480 = int_to_ptr.hbm [resolvable:$true] %s479
      %485 = dma.vmem_to_hbm [thread:$0]  %s478, 1024, %s480, [#allocation4], 256, 256, 16
    $region41: #{tpu_custom_call.1} parent=1 // pred_fallthru
      _
    // Predicated region
    $region42: #{tpu_custom_call.1} parent=1 // pred_check
      _
    $region43: #{tpu_custom_call.1} parent=1 // pred_check_branch
      %487 = sbr.rel (0) target = $region45
    $region44: #{tpu_custom_call.1} parent=1 // pred_region
      %489 = dma.done [#allocation4], 1024
    $region45: #{tpu_custom_call.1} parent=1 // pred_fallthru
      _
    %490 = vsyncpa [#allocation4], 1

// kernel: tpu_custom_call.1
$region0: #{tpu_custom_call.1}
  #allocation0 [shape = 'u32[]', space=smem, size = 0x4, offset = 0x4, fixed_abs, tag = 'smem constant byte address 0x4 - core index']
  #allocation1 [shape = 'u32[72,128]{1,0:T(1,128)}', space=vmem, size = 0x9000, scoped, tag = 'internal scratch']
  #allocation2 [shape = 'f32[1,1]{1,0:T(1,128)S(1)}', space=vmem, size = 0x200, scoped, tag = 'scoped memory for tpu_custom_call.1']
  %s0 = inlined_call_operand.vmem [shape: f32[256,4], index: 0, kind: input, shape index: {}]
  %s1 = inlined_call_operand.vmem [shape: f32[32,256], index: 1, kind: input, shape index: {}]
  %s2 = inlined_call_operand.vmem [shape: f32[8,4], index: 2, kind: input, shape index: {}]
  %s3 = inlined_call_operand.vmem [shape: f32[4,8], index: 3, kind: input, shape index: {}]
  %s4 = inlined_call_operand.<no memory space> [shape: f32[1,1], index: 4, kind: input, shape index: {}]
  %s5 = inlined_call_operand.vmem [shape: f32[32,1], index: 5, kind: input, shape index: {}]
  %s6 = inlined_call_operand.vmem [shape: f32[32,4], index: 6, kind: input, shape index: {}]
  %s7 = inlined_call_operand.vmem [shape: f32[4,32], index: 7, kind: input, shape index: {}]
  %s8 = inlined_call_operand.vmem [shape: f32[32,8], index: 8, kind: input, shape index: {}]
  %s9 = inlined_call_operand.hbm [shape: f32[32,256], index: 9, kind: output, shape index: {}]
  %s10 = sld [smem:[#allocation0]]
  $region46: #{tpu_custom_call.1} parent=0
    _
  %s12 = ssub.s32 1, %s10
  %s13 = scalar_select 0, %s12, %s10
  %v14 = vstv %s4
  %15 = vst [vmem:[#allocation2] sm:$0x1] %v14
  $region1: #{tpu_custom_call.1} parent=0
    #allocation3 [shape = 'u8[32768]{0}', space=vmem, size = 0x8000, scoped, tag = 'output window, operand 0, single buffered']
    #allocation4 [shape = 's32[1]{0}', space=sflag, size = 0x4, scoped, tag = 'scoped memory for tpu_custom_call.1']
    %16 = vsyncpa [#allocation4], 0
    // Predicated region
    $region2: #{tpu_custom_call.1} parent=1 // pred_check
      _
    $region3: #{tpu_custom_call.1} parent=1 // pred_check_branch
      %18 = sbr.rel (0) target = $region5
    $region4: #{tpu_custom_call.1} parent=1 // pred_region
      _
    $region5: #{tpu_custom_call.1} parent=1 // pred_fallthru
      _
    // Predicated region
    $region6: #{tpu_custom_call.1} parent=1 // pred_check
      _
    $region7: #{tpu_custom_call.1} parent=1 // pred_check_branch
      %20 = sbr.rel (0) target = $region9
    $region8: #{tpu_custom_call.1} parent=1 // pred_region
      _
    $region9: #{tpu_custom_call.1} parent=1 // pred_fallthru
      _
    // Predicated region
    $region10: #{tpu_custom_call.1} parent=1 // pred_check
      _
    $region11: #{tpu_custom_call.1} parent=1 // pred_check_branch
      %22 = sbr.rel (0) target = $region13
    $region12: #{tpu_custom_call.1} parent=1 // pred_region
      _
    $region13: #{tpu_custom_call.1} parent=1 // pred_fallthru
      _
    // Predicated region
    $region14: #{tpu_custom_call.1} parent=1 // pred_check
      _
    $region15: #{tpu_custom_call.1} parent=1 // pred_check_branch
      %24 = sbr.rel (0) target = $region17
    $region16: #{tpu_custom_call.1} parent=1 // pred_region
      _
    $region17: #{tpu_custom_call.1} parent=1 // pred_fallthru
      _
    // Predicated region
    $region18: #{tpu_custom_call.1} parent=1 // pred_check
      _
    $region19: #{tpu_custom_call.1} parent=1 // pred_check_branch
      %26 = sbr.rel (0) target = $region21
    $region20: #{tpu_custom_call.1} parent=1 // pred_region
      _
    $region21: #{tpu_custom_call.1} parent=1 // pred_fallthru
      _
    // Predicated region
    $region22: #{tpu_custom_call.1} parent=1 // pred_check
      _
    $region23: #{tpu_custom_call.1} parent=1 // pred_check_branch
      %28 = sbr.rel (0) target = $region25
    $region24: #{tpu_custom_call.1} parent=1 // pred_region
      _
    $region25: #{tpu_custom_call.1} parent=1 // pred_fallthru
      _
    // Predicated region
    $region26: #{tpu_custom_call.1} parent=1 // pred_check
      _
    $region27: #{tpu_custom_call.1} parent=1 // pred_check_branch
      %30 = sbr.rel (0) target = $region29
    $region28: #{tpu_custom_call.1} parent=1 // pred_region
      _
    $region29: #{tpu_custom_call.1} parent=1 // pred_fallthru
      _
    // Predicated region
    $region30: #{tpu_custom_call.1} parent=1 // pred_check
      _
    $region31: #{tpu_custom_call.1} parent=1 // pred_check_branch
      %32 = sbr.rel (0) target = $region33
    $region32: #{tpu_custom_call.1} parent=1 // pred_region
      _
    $region33: #{tpu_custom_call.1} parent=1 // pred_fallthru
      _
    // Predicated region
    $region34: #{tpu_custom_call.1} parent=1 // pred_check
      _
    $region35: #{tpu_custom_call.1} parent=1 // pred_check_branch
      %34 = sbr.rel (0) target = $region37
    $region36: #{tpu_custom_call.1} parent=1 // pred_region
      _
    $region37: #{tpu_custom_call.1} parent=1 // pred_fallthru
      _
    %v35 = vld [vmem:[%s1] sm:$0xff]
    %v36 = vld [vmem:[%s1 + $0x8] sm:$0xff]
    %v37 = vld [vmem:[%s1 + $0x10] sm:$0xff]
    %v38 = vld [vmem:[%s1 + $0x18] sm:$0xff]
    %v39 = vld [vmem:[%s1 + $0x20] sm:$0xff]
    %v40 = vld [vmem:[%s1 + $0x28] sm:$0xff]
    %v41 = vld [vmem:[%s1 + $0x30] sm:$0xff]
    %v42 = vld [vmem:[%s1 + $0x38] sm:$0xff]
    %v43 = vld [vmem:[%s0] sm:$0xff]
    %v44 = vld [vmem:[%s0 + $0x8] sm:$0xff]
    %v45 = vld [vmem:[%s0 + $0x10] sm:$0xff]
    %v46 = vld [vmem:[%s0 + $0x18] sm:$0xff]
    %v47 = vld [vmem:[%s0 + $0x20] sm:$0xff]
    %v48 = vld [vmem:[%s0 + $0x28] sm:$0xff]
    %v49 = vld [vmem:[%s0 + $0x30] sm:$0xff]
    %v50 = vld [vmem:[%s0 + $0x38] sm:$0xff]
    %v51 = vld [vmem:[%s0 + $0x40] sm:$0xff]
    %v52 = vld [vmem:[%s0 + $0x48] sm:$0xff]
    %v53 = vld [vmem:[%s0 + $0x50] sm:$0xff]
    %v54 = vld [vmem:[%s0 + $0x58] sm:$0xff]
    %v55 = vld [vmem:[%s0 + $0x60] sm:$0xff]
    %v56 = vld [vmem:[%s0 + $0x68] sm:$0xff]
    %v57 = vld [vmem:[%s0 + $0x70] sm:$0xff]
    %v58 = vld [vmem:[%s0 + $0x78] sm:$0xff]
    %v59 = vld [vmem:[%s0 + $0x80] sm:$0xff]
    %v60 = vld [vmem:[%s0 + $0x88] sm:$0xff]
    %v61 = vld [vmem:[%s0 + $0x90] sm:$0xff]
    %v62 = vld [vmem:[%s0 + $0x98] sm:$0xff]
    %v63 = vld [vmem:[%s0 + $0xa0] sm:$0xff]
    %v64 = vld [vmem:[%s0 + $0xa8] sm:$0xff]
    %v65 = vld [vmem:[%s0 + $0xb0] sm:$0xff]
    %v66 = vld [vmem:[%s0 + $0xb8] sm:$0xff]
    %v67 = vld [vmem:[%s0 + $0xc0] sm:$0xff]
    %v68 = vld [vmem:[%s0 + $0xc8] sm:$0xff]
    %v69 = vld [vmem:[%s0 + $0xd0] sm:$0xff]
    %v70 = vld [vmem:[%s0 + $0xd8] sm:$0xff]
    %v71 = vld [vmem:[%s0 + $0xe0] sm:$0xff]
    %v72 = vld [vmem:[%s0 + $0xe8] sm:$0xff]
    %v73 = vld [vmem:[%s0 + $0xf0] sm:$0xff]
    %v74 = vld [vmem:[%s0 + $0xf8] sm:$0xff]
    %75 = vmatpush.msra.mxu0 %v58
    %76 = vmatpush.msra.mxu0 %v57
    %77 = vmatpush.msra.mxu0 %v56
    %78 = vmatpush.msra.mxu0 %v55
    %79 = vmatpush.msra.mxu0 %v54
    %80 = vmatpush.msra.mxu0 %v53
    %81 = vmatpush.msra.mxu0 %v52
    %82 = vmatpush.msra.mxu0 %v51
    %83 = vmatpush.msra.mxu0 %v50
    %84 = vmatpush.msra.mxu0 %v49
    %85 = vmatpush.msra.mxu0 %v48
    %86 = vmatpush.msra.mxu0 %v47
    %87 = vmatpush.msra.mxu0 %v46
    %88 = vmatpush.msra.mxu0 %v45
    %89 = vmatpush.msra.mxu0 %v44
    %90 = vmatpush.msra.mxu0 %v43
    %91 = vmatmul.f32.gmra.mxu0 %v35
    %v92 = vpop.f32.mrf.mxu0
    %v93 = vadd.f32 0.0, %v92
    %94 = vmatmul.f32.gmra.mxu0 %v37
    %v95 = vpop.f32.mrf.mxu0
    %v96 = vadd.f32 0.0, %v95
    %97 = vmatmul.f32.gmra.mxu0 %v39
    %v98 = vpop.f32.mrf.mxu0
    %v99 = vadd.f32 0.0, %v98
    %100 = vmatmul.f32.gmra.mxu0 %v41
    %v101 = vpop.f32.mrf.mxu0
    %v102 = vadd.f32 0.0, %v101
    %103 = vdwg.mxu0
    %104 = vmatpush.msra.mxu0 %v74
    %105 = vmatpush.msra.mxu0 %v73
    %106 = vmatpush.msra.mxu0 %v72
    %107 = vmatpush.msra.mxu0 %v71
    %108 = vmatpush.msra.mxu0 %v70
    %109 = vmatpush.msra.mxu0 %v69
    %110 = vmatpush.msra.mxu0 %v68
    %111 = vmatpush.msra.mxu0 %v67
    %112 = vmatpush.msra.mxu0 %v66
    %113 = vmatpush.msra.mxu0 %v65
    %114 = vmatpush.msra.mxu0 %v64
    %115 = vmatpush.msra.mxu0 %v63
    %116 = vmatpush.msra.mxu0 %v62
    %117 = vmatpush.msra.mxu0 %v61
    %118 = vmatpush.msra.mxu0 %v60
    %119 = vmatpush.msra.mxu0 %v59
    %120 = vmatmul.f32.gmra.mxu0 %v36
    %v121 = vpop.f32.mrf.mxu0
    %v122 = vadd.f32 %v93, %v121
    %123 = vmatmul.f32.gmra.mxu0 %v38
    %v124 = vpop.f32.mrf.mxu0
    %v125 = vadd.f32 %v96, %v124
    %126 = vmatmul.f32.gmra.mxu0 %v40
    %v127 = vpop.f32.mrf.mxu0
    %v128 = vadd.f32 %v99, %v127
    %129 = vmatmul.f32.gmra.mxu0 %v42
    %v130 = vpop.f32.mrf.mxu0
    %v131 = vadd.f32 %v102, %v130
    %132 = vdwg.mxu0
    %v133 = vmul.f32 %v122, 0.0078125
    %v134 = vmul.f32 %v125, 0.0078125
    %v135 = vmul.f32 %v128, 0.0078125
    %v136 = vmul.f32 %v131, 0.0078125
    %v137 = vld [vmem:[%s6] sm:$0xff]
    %v138 = vld [vmem:[%s6 + $0x8] sm:$0xff]
    %v139 = vld [vmem:[%s6 + $0x10] sm:$0xff]
    %v140 = vld [vmem:[%s6 + $0x18] sm:$0xff]
    %v141 = vld [vmem:[%s7] sm:$0xf]
    %v142 = vld [vmem:[%s8] sm:$0xff]
    %v143 = vld [vmem:[%s8 + $0x8] sm:$0xff]
    %v144 = vld [vmem:[%s8 + $0x10] sm:$0xff]
    %v145 = vld [vmem:[%s8 + $0x18] sm:$0xff]
    %v146 = vld [vmem:[%s5] sm:$0xff]
    %v147 = vld [vmem:[%s5 + $0x8] sm:$0xff]
    %v148 = vld [vmem:[%s5 + $0x10] sm:$0xff]
    %v149 = vld [vmem:[%s5 + $0x18] sm:$0xff]
    %151 = vset.pattern.permute.xlu0 0
    %152 = vperm.xlu0 %151, %v146
    %v153 = vpop.permute.xlu0 %152
    %156 = vset.pattern.permute.xlu0 0
    %157 = vperm.xlu0 %156, %v147
    %v158 = vpop.permute.xlu0 %157
    %161 = vset.pattern.permute.xlu0 0
    %162 = vperm.xlu0 %161, %v148
    %v163 = vpop.permute.xlu0 %162
    %166 = vset.pattern.permute.xlu0 0
    %167 = vperm.xlu0 %166, %v149
    %v168 = vpop.permute.xlu0 %167
    %v170 = vmul.f32 %v133, %v153
    %v171 = vmul.f32 %v134, %v158
    %v172 = vmul.f32 %v135, %v163
    %v173 = vmul.f32 %v136, %v168
    %v174 = vld [vmem:[#allocation2] sm:$0x1]
    %v176 = vperm.slane %v174, 0
    %177 = vset.pattern.permute.xlu0 0
    %178 = vperm.xlu0 %177, %v176
    %v179 = vpop.permute.xlu0 %178
    %vm181 = vcmask 261120
    %v183 = vsel %vm181, %v141, 0
    %185 = vmatpush.msra.mxu0 0.0
    %186 = vmatpush.msra.mxu0 0.0
    %187 = vmatpush.msra.mxu0 0.0
    %188 = vmatpush.msra.mxu0 0.0
    %189 = vmatpush.msra.mxu0 0.0
    %190 = vmatpush.msra.mxu0 0.0
    %191 = vmatpush.msra.mxu0 0.0
    %192 = vmatpush.msra.mxu0 0.0
    %193 = vmatpush.msra.mxu0 0.0
    %194 = vmatpush.msra.mxu0 0.0
    %195 = vmatpush.msra.mxu0 0.0
    %196 = vmatpush.msra.mxu0 0.0
    %197 = vmatpush.msra.mxu0 %v173
    %198 = vmatpush.msra.mxu0 %v172
    %199 = vmatpush.msra.mxu0 %v171
    %200 = vmatpush.msra.mxu0 %v170
    %201 = vmatmul.f32.gmra.mxu0 %v183
    %v202 = vpop.f32.mrf.mxu0
    %v203 = vadd.f32 %v179, %v202
    %204 = vdwg.mxu0
    %v205 = vlaneseq
    %v206 = vand.u32 %v205, 127
    %vm207 = vcmask 27648
    %v208 = vsel %vm207, %v203, -inf
    %209 = vmax.xlane.f32.xlu0 %v208
    %v210 = vpop.xlane.xlu0 %209
    %vm211 = vcmp.eq.f32.partialorder %v203, %v210
    %v212 = vsel %vm211, %v206, 4
    %v213 = vsel %vm207, %v212, 2147483647
    %v214 = vand.u32 %v213, 65535
    %v215 = vshra.s32 %v213, 16
    %v216 = vcvt.s32.f32 %v214
    %v217 = vcvt.s32.f32 %v215
    %218 = vmin.xlane.f32.xlu0 %v217
    %v219 = vpop.xlane.xlu0 %218
    %vm220 = vcmp.eq.f32.partialorder %v217, %v219
    %v221 = vsel %vm220, %v216, inf
    %222 = vmin.xlane.f32.xlu0 %v221
    %v223 = vpop.xlane.xlu0 %222
    %v224 = vcvt.f32.s32 %v223
    %v225 = vcvt.f32.s32 %v219
    %v226 = vshll.u32 %v225, 16
    %v227 = vadd.s32 %v226, %v224
    %vm228 = vcmp.eq.s32.totalorder %v206, %v227
    %v229 = vsel %vm228, 1, 0
    %v230 = vcvt.s32.f32 %v229
    %vm231 = vcmask 31744
    %v233 = vsel %vm231, %v137, 0
    %v236 = vsel %vm231, %v138, 0
    %v239 = vsel %vm231, %v139, 0
    %v242 = vsel %vm231, %v140, 0
    %vm244 = vcmask 1043456
    %v246 = vsel %vm244, %v230, 0
    %248 = vmatpush.msra.mxu0 0.0
    %249 = vmatpush.msra.mxu0 0.0
    %250 = vmatpush.msra.mxu0 0.0
    %251 = vmatpush.msra.mxu0 0.0
    %252 = vmatpush.msra.mxu0 0.0
    %253 = vmatpush.msra.mxu0 0.0
    %254 = vmatpush.msra.mxu0 0.0
    %255 = vmatpush.msra.mxu0 0.0
    %256 = vmatpush.msra.mxu0 0.0
    %257 = vmatpush.msra.mxu0 0.0
    %258 = vmatpush.msra.mxu0 0.0
    %259 = vmatpush.msra.mxu0 0.0
    %260 = vmatpush.msra.mxu0 0.0
    %261 = vmatpush.msra.mxu0 0.0
    %262 = vmatpush.msra.mxu0 0.0
    %263 = vmatpush.msra.mxu0 %v246
    %264 = vmatmul.f32.gmra.mxu0 %v233
    %v265 = vpop.f32.mrf.mxu0
    %v266 = vadd.f32 0.0, %v265
    %267 = vmatmul.f32.gmra.mxu0 %v236
    %v268 = vpop.f32.mrf.mxu0
    %v269 = vadd.f32 0.0, %v268
    %270 = vmatmul.f32.gmra.mxu0 %v239
    %v271 = vpop.f32.mrf.mxu0
    %v272 = vadd.f32 0.0, %v271
    %273 = vmatmul.f32.gmra.mxu0 %v242
    %v274 = vpop.f32.mrf.mxu0
    %v275 = vadd.f32 0.0, %v274
    %276 = vdwg.mxu0
    %v277 = vmul.f32 %v133, %v266
    %v278 = vmul.f32 %v134, %v269
    %v279 = vmul.f32 %v135, %v272
    %v280 = vmul.f32 %v136, %v275
    %v281 = vsel %vm231, %v277, 0.0
    %282 = vadd.xlane.f32.xlu0 %v281
    %v283 = vpop.xlane.xlu0 %282
    %v284 = vsel %vm231, %v278, 0.0
    %285 = vadd.xlane.f32.xlu0 %v284
    %v286 = vpop.xlane.xlu0 %285
    %v287 = vsel %vm231, %v279, 0.0
    %288 = vadd.xlane.f32.xlu0 %v287
    %v289 = vpop.xlane.xlu0 %288
    %v290 = vsel %vm231, %v280, 0.0
    %291 = vadd.xlane.f32.xlu0 %v290
    %v292 = vpop.xlane.xlu0 %291
    %v293 = vsub.f32 %v133, %v283
    %v294 = vsub.f32 %v134, %v286
    %v295 = vsub.f32 %v135, %v289
    %v296 = vsub.f32 %v136, %v292
    %v297 = vmax.f32 %v293, 0.0
    %v298 = vmax.f32 %v294, 0.0
    %v299 = vmax.f32 %v295, 0.0
    %v300 = vmax.f32 %v296, 0.0
    %v301 = vsel %vm231, %v297, 0.0
    %302 = vadd.xlane.f32.xlu0 %v301
    %v303 = vpop.xlane.xlu0 %302
    %v304 = vsel %vm231, %v298, 0.0
    %305 = vadd.xlane.f32.xlu0 %v304
    %v306 = vpop.xlane.xlu0 %305
    %v307 = vsel %vm231, %v299, 0.0
    %308 = vadd.xlane.f32.xlu0 %v307
    %v309 = vpop.xlane.xlu0 %308
    %v310 = vsel %vm231, %v300, 0.0
    %311 = vadd.xlane.f32.xlu0 %v310
    %v312 = vpop.xlane.xlu0 %311
    %v313 = vmul.f32 %v142, %v303
    %v314 = vmul.f32 %v143, %v306
    %v315 = vmul.f32 %v144, %v309
    %v316 = vmul.f32 %v145, %v312
    %317 = vmatpush.msra.mxu0 0.0
    %318 = vmatpush.msra.mxu0 0.0
    %319 = vmatpush.msra.mxu0 0.0
    %320 = vmatpush.msra.mxu0 0.0
    %321 = vmatpush.msra.mxu0 0.0
    %322 = vmatpush.msra.mxu0 0.0
    %323 = vmatpush.msra.mxu0 0.0
    %324 = vmatpush.msra.mxu0 0.0
    %325 = vmatpush.msra.mxu0 0.0
    %326 = vmatpush.msra.mxu0 0.0
    %327 = vmatpush.msra.mxu0 0.0
    %328 = vmatpush.msra.mxu0 0.0
    %329 = vmatpush.msra.mxu0 %v316
    %330 = vmatpush.msra.mxu0 %v315
    %331 = vmatpush.msra.mxu0 %v314
    %332 = vmatpush.msra.mxu0 %v313
    %333 = vmatmul.f32.gmra.mxu0 %v183
    %v334 = vpop.f32.mrf.mxu0
    %v335 = vadd.f32 0.0, %v334
    %336 = vdwg.mxu0
    %v337 = vld [vmem:[%s2] sm:$0xff]
    %vm338 = vcmask 64512
    %v340 = vsel %vm338, %v335, 0
    %342 = vmatpush.msra.mxu0 0.0
    %343 = vmatpush.msra.mxu0 0.0
    %344 = vmatpush.msra.mxu0 0.0
    %345 = vmatpush.msra.mxu0 0.0
    %346 = vmatpush.msra.mxu0 0.0
    %347 = vmatpush.msra.mxu0 0.0
    %348 = vmatpush.msra.mxu0 0.0
    %349 = vmatpush.msra.mxu0 0.0
    %350 = vmatpush.msra.mxu0 0.0
    %351 = vmatpush.msra.mxu0 0.0
    %352 = vmatpush.msra.mxu0 0.0
    %353 = vmatpush.msra.mxu0 0.0
    %354 = vmatpush.msra.mxu0 0.0
    %355 = vmatpush.msra.mxu0 0.0
    %356 = vmatpush.msra.mxu0 0.0
    %357 = vmatpush.msra.mxu0 %v337
    %358 = vmatmul.f32.gmra.mxu0 %v340
    %v359 = vpop.f32.mrf.mxu0
    %v360 = vadd.f32 0.0, %v359
    %361 = vdwg.mxu0
    %v362 = vmax.f32 %v360, 0.0
    %v363 = vld [vmem:[%s3] sm:$0xf]
    %v365 = vsel %vm231, %v362, 0
    %v368 = vsel %vm244, %v363, 0
    %370 = vmatpush.msra.mxu0 0.0
    %371 = vmatpush.msra.mxu0 0.0
    %372 = vmatpush.msra.mxu0 0.0
    %373 = vmatpush.msra.mxu0 0.0
    %374 = vmatpush.msra.mxu0 0.0
    %375 = vmatpush.msra.mxu0 0.0
    %376 = vmatpush.msra.mxu0 0.0
    %377 = vmatpush.msra.mxu0 0.0
    %378 = vmatpush.msra.mxu0 0.0
    %379 = vmatpush.msra.mxu0 0.0
    %380 = vmatpush.msra.mxu0 0.0
    %381 = vmatpush.msra.mxu0 0.0
    %382 = vmatpush.msra.mxu0 0.0
    %383 = vmatpush.msra.mxu0 0.0
    %384 = vmatpush.msra.mxu0 0.0
    %385 = vmatpush.msra.mxu0 %v368
    %386 = vmatmul.f32.gmra.mxu0 %v365
    %v387 = vpop.f32.mrf.mxu0
    %v388 = vadd.f32 0.0, %v387
    %389 = vdwg.mxu0
    %v390 = vxor.u32 %v388, 2147483648
    %v391 = vmul.f32 %v390, 1.442695
    %v392 = vpow.pop %v391
    %v393 = vadd.f32 %v392, 1.0
    %v394 = vrcp.pop %v393
    %v395 = vmul.f32 %v393, %v394
    %v396 = vsub.f32 1.0, %v395
    %v397 = vmul.f32 %v394, %v396
    %v398 = vadd.f32 %v394, %v397
    %vm399 = vweird.f32 %v393
    %vm400 = vweird.f32 %v394
    %vm401 = vmor %vm399, %vm400
    %v402 = vsel %vm401, %v394, %v398
    %v403 = vand.u32 2147483647, %v393
    %vm404 = vcmp.eq.f32.partialorder %v403, 8.507059e+37
    %v405 = vand.u32 %v393, 2147483648
    %v406 = vor.u32 1.1754944e-38, %v405
    %v407 = vsel %vm404, %v406, %v402
    %v408 = vmul.f32 1.0, %v407
    %v410 = vsel %vm244, %v408, 0
    %412 = vmatpush.msra.mxu0 0.0
    %413 = vmatpush.msra.mxu0 0.0
    %414 = vmatpush.msra.mxu0 0.0
    %415 = vmatpush.msra.mxu0 0.0
    %416 = vmatpush.msra.mxu0 0.0
    %417 = vmatpush.msra.mxu0 0.0
    %418 = vmatpush.msra.mxu0 0.0
    %419 = vmatpush.msra.mxu0 0.0
    %420 = vmatpush.msra.mxu0 0.0
    %421 = vmatpush.msra.mxu0 0.0
    %422 = vmatpush.msra.mxu0 0.0
    %423 = vmatpush.msra.mxu0 0.0
    %424 = vmatpush.msra.mxu0 0.0
    %425 = vmatpush.msra.mxu0 0.0
    %426 = vmatpush.msra.mxu0 0.0
    %427 = vmatpush.msra.mxu0 %v410
    %428 = vmatmul.f32.gmra.mxu0 %v233
    %v429 = vpop.f32.mrf.mxu0
    %v430 = vadd.f32 0.0, %v429
    %431 = vmatmul.f32.gmra.mxu0 %v236
    %v432 = vpop.f32.mrf.mxu0
    %v433 = vadd.f32 0.0, %v432
    %434 = vmatmul.f32.gmra.mxu0 %v239
    %v435 = vpop.f32.mrf.mxu0
    %v436 = vadd.f32 0.0, %v435
    %437 = vmatmul.f32.gmra.mxu0 %v242
    %v438 = vpop.f32.mrf.mxu0
    %v439 = vadd.f32 0.0, %v438
    %440 = vdwg.mxu0
    %v441 = vmul.f32 %v430, %v142
    %v442 = vmul.f32 %v433, %v143
    %v443 = vmul.f32 %v436, %v144
    %v444 = vmul.f32 %v439, %v145
    %v445 = vsel %vm338, %v441, 0.0
    %446 = vadd.xlane.f32.xlu0 %v445
    %v447 = vpop.xlane.xlu0 %446
    %v448 = vsel %vm338, %v442, 0.0
    %449 = vadd.xlane.f32.xlu0 %v448
    %v450 = vpop.xlane.xlu0 %449
    %v451 = vsel %vm338, %v443, 0.0
    %452 = vadd.xlane.f32.xlu0 %v451
    %v453 = vpop.xlane.xlu0 %452
    %v454 = vsel %vm338, %v444, 0.0
    %455 = vadd.xlane.f32.xlu0 %v454
    %v456 = vpop.xlane.xlu0 %455
    %v457 = vmul.f32 %v35, %v447
    %v458 = vmul.f32 %v36, %v447
    %v459 = vmul.f32 %v37, %v450
    %v460 = vmul.f32 %v38, %v450
    %v461 = vmul.f32 %v39, %v453
    %v462 = vmul.f32 %v40, %v453
    %v463 = vmul.f32 %v41, %v456
    %v464 = vmul.f32 %v42, %v456
    %465 = vst [vmem:[#allocation3] sm:$0xff] %v457
    %466 = vst [vmem:[#allocation3 + $0x8] sm:$0xff] %v458
    %467 = vst [vmem:[#allocation3 + $0x10] sm:$0xff] %v459
    %468 = vst [vmem:[#allocation3 + $0x18] sm:$0xff] %v460
    %469 = vst [vmem:[#allocation3 + $0x20] sm:$0xff] %v461
    %470 = vst [vmem:[#allocation3 + $0x28] sm:$0xff] %v462
    %471 = vst [vmem:[#allocation3 + $0x30] sm:$0xff] %v463
    %472 = vst [vmem:[#allocation3 + $0x38] sm:$0xff] %v464
    // Predicated region
    $region38: #{tpu_custom_call.1} parent=1 // pred_check
      _
    $region39: #{tpu_custom_call.1} parent=1 // pred_check_branch
      %474 = sbr.rel (0) target = $region41
    $region40: #{tpu_custom_call.1} parent=1 // pred_region
      %476 = vsyncadd [#allocation4], 0
      %s477 = sshll.u32 [#allocation3], 4
      %s478 = int_to_ptr.vmem [resolvable:$true] %s477
      %s479 = sshll.u32 %s9, 4
      %s480 = int_to_ptr.hbm [resolvable:$true] %s479
      %485 = dma.vmem_to_hbm [thread:$0]  %s478, 1024, %s480, [#allocation4], 256, 256, 16
    $region41: #{tpu_custom_call.1} parent=1 // pred_fallthru
      _
    // Predicated region
    $region42: #{tpu_custom_call.1} parent=1 // pred_check
      _
    $region43: #{tpu_custom_call.1} parent=1 // pred_check_branch
      %487 = sbr.rel (0) target = $region45
    $region44: #{tpu_custom_call.1} parent=1 // pred_region
      %489 = dma.done [#allocation4], 1024
    $region45: #{tpu_custom_call.1} parent=1 // pred_fallthru
      _
    %490 = vsyncpa [#allocation4], 1

</llo_original>
